<compile_context>
chip_gen: v7x
topology: tpu7x:2x2x1
jax: 0.10.0
libtpu: 0.0.40
codegen_flags: <defaults>
</compile_context>

<pallas_src>
import functools

import jax
import jax.numpy as jnp
import numpy as np
from jax.experimental import pallas as pl
from jax.experimental.pallas import tpu as pltpu


# ---------------------------------------------------------------------------
# Static tap-offset metadata (cross-correlation, "same" padding = k//2).
# ---------------------------------------------------------------------------
def _make_offsets(square_kernel_size, band_kernel_size):
    sq, bd = square_kernel_size, band_kernel_size
    offs_hw = tuple((i - sq // 2, j - sq // 2)
                    for i in range(sq) for j in range(sq))
    offs_w = tuple((0, j - bd // 2) for j in range(bd))
    offs_h = tuple((i - bd // 2, 0) for i in range(bd))
    return (offs_hw, offs_w, offs_h)


def _choose_window(C, id_ch):
    """Smallest channel window [c_lo, C) that (a) contains every branch
    channel, (b) has an 8-multiple width (sublane-aligned BlockSpec), and
    (c) starts on a boundary of its own width so it is addressable as one
    block.  Falls back to the full channel range when no such window exists."""
    for cw in range(8, C, 8):
        c_lo = C - cw
        if c_lo <= id_ch and c_lo % cw == 0:
            return c_lo, cw
    return 0, C


# ---------------------------------------------------------------------------
# Fused Pallas kernel: one batch element per grid step.
#   x_ref    : (CW, HW)       input channel window (channels x flat spatial)
#   hidx_ref : (1, HW) int32  row index of every flattened position
#   widx_ref : (1, HW) int32  col index of every flattened position
#   taps_ref : (3, gc, Tmax)  depthwise tap weights per branch (zero padded)
#   pw_ref   : (3, gc, gc)    1x1 conv weights (out, in) per branch
#   fb_ref   : (3, gc, 1)     fused bias (pw @ dw_b + pw_b) per branch
#   out_ref  : (CW, HW)       output channel window (aliases the input array)
# ---------------------------------------------------------------------------
def _inception_kernel(x_ref, hidx_ref, widx_ref, taps_ref, pw_ref, fb_ref,
                      out_ref, *, idw, gc, H, W, branch_offsets, use_mxu):
    HW = H * W

    # Identity channels *inside* the window (only those needed for block
    # alignment) pass straight through; identity channels below the window
    # never enter the kernel at all (input/output aliasing keeps them put).
    if idw > 0:
        out_ref[:idw, :] = x_ref[:idw, :]

    hidx = hidx_ref[...]        # (1, HW)
    widx = widx_ref[...]        # (1, HW)

    # Per-axis 1-D zero-padding validity masks, cached and AND'd per tap.
    axis_masks = {}

    def axis_mask(axis, idx, d, size):
        key = (axis, d)
        if key not in axis_masks:
            axis_masks[key] = (idx < size - d) if d > 0 else (idx >= -d)
        return axis_masks[key]

    def tap_mask(dh, dw):
        m = None
        if dw != 0:
            m = axis_mask("w", widx, dw, W)
        if dh != 0:
            mh = axis_mask("h", hidx, dh, H)
            m = mh if m is None else (m & mh)
        return m

    for b, offs in enumerate(branch_offsets):
        coff = idw + b * gc
        xb = x_ref[coff:coff + gc, :].astype(jnp.float32)      # (gc, HW)
        tw = taps_ref[b].astype(jnp.float32)                   # (gc, Tmax)

        # Depthwise conv: rolled (XLU) + masked windows * per-channel taps.
        acc = None
        for t, (dh, dw) in enumerate(offs):
            s = dh * W + dw
            v = xb if s == 0 else pltpu.roll(xb, (-s) % HW, axis=1)
            m = tap_mask(dh, dw)
            if m is not None:
                v = jnp.where(m, v, 0.0)
            term = v * tw[:, t:t + 1]
            acc = term if acc is None else acc + term

        # Pointwise 1x1 conv (+ depthwise bias folded into pointwise bias).
        fb = fb_ref[b].astype(jnp.float32)                     # (gc, 1)
        if use_mxu:
            y = jnp.dot(pw_ref[b].astype(jnp.float32), acc,
                        preferred_element_type=jnp.float32)
        else:
            pwb = pw_ref[b].astype(jnp.float32)                # (gc, gc)
            y = None
            for ci in range(gc):
                term = pwb[:, ci:ci + 1] * acc[ci:ci + 1, :]
                y = term if y is None else y + term
        y = y + fb
        out_ref[coff:coff + gc, :] = y.astype(out_ref.dtype)


# ---------------------------------------------------------------------------
# Module wrapper (NCHW interface, like the PyTorch module).
# ---------------------------------------------------------------------------
def inception_dwconv2d_lightweight(x, params):
    """x: (N, C, H, W) float32.

    Note: the pallas output aliases x; donate x (jit donate_argnums) for the
    full HBM-traffic win. The function is correct either way (XLA inserts a
    copy when x cannot be donated).
    """
    N, C, H, W = x.shape
    gc = params["gc"]
    sq = params["square_kernel_size"]
    bd = params["band_kernel_size"]
    id_ch = C - 3 * gc
    HW = H * W

    branch_offsets = _make_offsets(sq, bd)
    n_taps = sum(len(o) for o in branch_offsets)
    Tmax = max(len(o) for o in branch_offsets)

    # Channel window actually touched by the kernel.
    c_lo, CW = _choose_window(C, id_ch)
    idw = id_ch - c_lo          # identity rows copied through in-kernel
    cblk = c_lo // CW           # block index of the window along channels

    # Weight prep (tiny, O(gc^2)):  flatten taps, extract 1x1 weights, fold
    # the depthwise bias through the pointwise conv.
    taps, pws, fbs = [], [], []
    for (dw_w, dw_b, pw_w, pw_b) in (params["hw"], params["w"], params["h"]):
        t = dw_w.reshape(gc, -1).astype(jnp.float32)           # (gc, kh*kw)
        t = jnp.pad(t, ((0, 0), (0, Tmax - t.shape[1])))
        pw2 = pw_w[:, :, 0, 0].astype(jnp.float32)             # (out, in)
        fb = pw2 @ dw_b.astype(jnp.float32) + pw_b.astype(jnp.float32)
        taps.append(t)
        pws.append(pw2)
        fbs.append(fb.reshape(gc, 1))
    taps_all = jnp.stack(taps)                                 # (3, gc, Tmax)
    pw_all = jnp.stack(pws)                                    # (3, gc, gc)
    fb_all = jnp.stack(fbs)                                    # (3, gc, 1)

    # Small (1, HW) row/col index vectors for the zero-padding masks.
    hw_ar = np.arange(HW, dtype=np.int32)
    hidx = jnp.asarray((hw_ar // W)[None, :])
    widx = jnp.asarray((hw_ar % W)[None, :])

    # Free reshape (merges contiguous minor dims): NCHW -> (N, C, H*W).
    x_flat = x.reshape(N, C, HW)

    kernel = functools.partial(
        _inception_kernel, idw=idw, gc=gc, H=H, W=W,
        branch_offsets=branch_offsets, use_mxu=(gc >= 16))

    itemsize = x.dtype.itemsize
    cost = pl.CostEstimate(
        flops=2 * N * HW * gc * (n_taps + 3 * gc),
        transcendentals=0,
        bytes_accessed=(N * 2 * CW * HW * itemsize + 2 * HW * 4
                        + (taps_all.size + pw_all.size + fb_all.size) * 4))

    out_flat = pl.pallas_call(
        kernel,
        out_shape=jax.ShapeDtypeStruct((N, C, HW), x.dtype),
        grid=(N,),
        in_specs=[
            pl.BlockSpec((None, CW, HW), lambda n: (n, cblk, 0)),
            pl.BlockSpec((1, HW), lambda n: (0, 0)),
            pl.BlockSpec((1, HW), lambda n: (0, 0)),
            pl.BlockSpec((3, gc, Tmax), lambda n: (0, 0, 0)),
            pl.BlockSpec((3, gc, gc), lambda n: (0, 0, 0)),
            pl.BlockSpec((3, gc, 1), lambda n: (0, 0, 0)),
        ],
        out_specs=pl.BlockSpec((None, CW, HW), lambda n: (n, cblk, 0)),
        input_output_aliases={0: 0},
        compiler_params=pltpu.CompilerParams(
            dimension_semantics=("parallel",)),
        cost_estimate=cost,
    )(x_flat, hidx, widx, taps_all, pw_all, fb_all)

    return out_flat.reshape(N, C, H, W)


# ---------------------------------------------------------------------------
# Deterministic parameter init (synthetic; shapes match the nn.Module).
# ---------------------------------------------------------------------------
def init_params(key, in_channels, square_kernel_size=3, band_kernel_size=9,
                branch_ratio=0.125):
    gc = int(in_channels * branch_ratio)

    def branch_params(k, kh, kw):
        k1, k2, k3, k4 = jax.random.split(k, 4)
        dw_w = jax.random.normal(k1, (gc, 1, kh, kw), jnp.float32) * 0.1
        dw_b = jax.random.normal(k2, (gc,), jnp.float32) * 0.1
        pw_w = jax.random.normal(k3, (gc, gc, 1, 1), jnp.float32) * 0.1
        pw_b = jax.random.normal(k4, (gc,), jnp.float32) * 0.1
        return (dw_w, dw_b, pw_w, pw_b)

    k_hw, k_w, k_h = jax.random.split(key, 3)
    return {
        "gc": gc,
        "square_kernel_size": square_kernel_size,
        "band_kernel_size": band_kernel_size,
        "hw": branch_params(k_hw, square_kernel_size, square_kernel_size),
        "w": branch_params(k_w, 1, band_kernel_size),
        "h": branch_params(k_h, band_kernel_size, 1),
    }


# ---------------------------------------------------------------------------
# Pure-JAX reference (lax.conv) for correctness check.
# ---------------------------------------------------------------------------
def _ref_branch(x_nchw, dw_w, dw_b, pw_w, pw_b, pad_h, pad_w):
    gc = x_nchw.shape[1]
    dn = ("NCHW", "OIHW", "NCHW")
    y = jax.lax.conv_general_dilated(
        x_nchw, dw_w, (1, 1), ((pad_h, pad_h), (pad_w, pad_w)),
        feature_group_count=gc, dimension_numbers=dn)
    y = y + dw_b.reshape(1, gc, 1, 1)
    y = jax.lax.conv_general_dilated(
        y, pw_w, (1, 1), ((0, 0), (0, 0)), dimension_numbers=dn)
    return y + pw_b.reshape(1, gc, 1, 1)


def _ref_forward(x, params):
    gc = params["gc"]
    C = x.shape[1]
    id_ch = C - 3 * gc
    sq = params["square_kernel_size"]
    bd = params["band_kernel_size"]
    x_id = x[:, :id_ch]
    x_hw = x[:, id_ch:id_ch + gc]
    x_w = x[:, id_ch + gc:id_ch + 2 * gc]
    x_h = x[:, id_ch + 2 * gc:]
    return jnp.concatenate([
        x_id,
        _ref_branch(x_hw, *params["hw"], pad_h=sq // 2, pad_w=sq // 2),
        _ref_branch(x_w, *params["w"], pad_h=0, pad_w=bd // 2),
        _ref_branch(x_h, *params["h"], pad_h=bd // 2, pad_w=0),
    ], axis=1)


if __name__ == "__main__":
    key = jax.random.PRNGKey(0)
    k_x, k_p = jax.random.split(key)

    N, C, H, W = 2, 32, 16, 16           # gc = 4, identity channels = 20
    x = jax.random.normal(k_x, (N, C, H, W), jnp.float32)
    params = init_params(k_p, C)

    # Reference first: the fused call donates (and thereby consumes) x.
    ref = jax.block_until_ready(_ref_forward(x, params))

    fwd = jax.jit(functools.partial(inception_dwconv2d_lightweight,
                                    params=params), donate_argnums=0)
    out = jax.block_until_ready(fwd(x))

    assert out.shape == (N, C, H, W)
    np.testing.assert_allclose(np.asarray(out), np.asarray(ref),
                               rtol=1e-4, atol=1e-4)
    print("KERNEL_OK")
</pallas_src>

<mosaic_0001>
module attributes {stable_mosaic.version = 11 : i64} {
  func.func @_inception_kernel(%arg0: i32, %arg1: memref<1x16x256xf32, #tpu.memory_space<vmem>>, %arg2: memref<1x256xi32, #tpu.memory_space<vmem>>, %arg3: memref<1x256xi32, #tpu.memory_space<vmem>>, %arg4: memref<3x4x9xf32, #tpu.memory_space<vmem>>, %arg5: memref<3x4x4xf32, #tpu.memory_space<vmem>>, %arg6: memref<3x4x1xf32, #tpu.memory_space<vmem>>, %arg7: memref<1x16x256xf32, #tpu.memory_space<vmem>>) attributes {dimension_semantics = [#tpu.dimension_semantics<parallel>], iteration_bounds = array<i64: 2>, scalar_prefetch = 0 : i64, scratch_operands = 0 : i64, tpu.core_type = #tpu.core_type<tc>, window_params = [{transform_indices = @transform_0, window_bounds = array<i64: 1, 16, 256>}, {pipeline_mode = #tpu.pipeline_mode<synchronous>, transform_indices = @transform_1, window_bounds = array<i64: 1, 256>}, {pipeline_mode = #tpu.pipeline_mode<synchronous>, transform_indices = @transform_2, window_bounds = array<i64: 1, 256>}, {pipeline_mode = #tpu.pipeline_mode<synchronous>, transform_indices = @transform_3, window_bounds = array<i64: 3, 4, 9>}, {pipeline_mode = #tpu.pipeline_mode<synchronous>, transform_indices = @transform_4, window_bounds = array<i64: 3, 4, 4>}, {pipeline_mode = #tpu.pipeline_mode<synchronous>, transform_indices = @transform_5, window_bounds = array<i64: 3, 4, 1>}, {transform_indices = @transform_6, window_bounds = array<i64: 1, 16, 256>}]} {
    %c0 = arith.constant 0 : index
    %c0_0 = arith.constant 0 : index
    %c0_1 = arith.constant 0 : index
    %0 = vector.load %arg1[%c0, %c0_0, %c0_1] : memref<1x16x256xf32, #tpu.memory_space<vmem>>, vector<1x4x256xf32>
    %1 = vector.shape_cast %0 : vector<1x4x256xf32> to vector<4x256xf32>
    %c0_2 = arith.constant 0 : index
    %c0_3 = arith.constant 0 : index
    %c0_4 = arith.constant 0 : index
    %2 = vector.load %arg7[%c0_2, %c0_3, %c0_4] : memref<1x16x256xf32, #tpu.memory_space<vmem>>, vector<1x4x256xf32>
    %3 = vector.shape_cast %2 : vector<1x4x256xf32> to vector<4x256xf32>
    %4 = vector.shape_cast %1 : vector<4x256xf32> to vector<1x4x256xf32>
    tpu.vector_store %arg7[%c0_2, %c0_3, %c0_4], %4 {strides = array<i32>} : memref<1x16x256xf32, #tpu.memory_space<vmem>>, vector<1x4x256xf32>,
    %c0_5 = arith.constant 0 : index
    %c0_6 = arith.constant 0 : index
    %5 = vector.load %arg2[%c0_5, %c0_6] : memref<1x256xi32, #tpu.memory_space<vmem>>, vector<1x256xi32>
    %c0_7 = arith.constant 0 : index
    %c0_8 = arith.constant 0 : index
    %6 = vector.load %arg3[%c0_7, %c0_8] : memref<1x256xi32, #tpu.memory_space<vmem>>, vector<1x256xi32>
    %c0_9 = arith.constant 0 : index
    %c4 = arith.constant 4 : index
    %c0_10 = arith.constant 0 : index
    %7 = vector.load %arg1[%c0_9, %c4, %c0_10] : memref<1x16x256xf32, #tpu.memory_space<vmem>>, vector<1x4x256xf32>
    %8 = vector.shape_cast %7 : vector<1x4x256xf32> to vector<4x256xf32>
    %c0_11 = arith.constant 0 : index
    %c0_12 = arith.constant 0 : index
    %c0_13 = arith.constant 0 : index
    %9 = vector.load %arg4[%c0_11, %c0_12, %c0_13] : memref<3x4x9xf32, #tpu.memory_space<vmem>>, vector<1x4x9xf32>
    %10 = vector.shape_cast %9 : vector<1x4x9xf32> to vector<4x9xf32>
    %c17_i32 = arith.constant 17 : i32
    %11 = tpu.dynamic_rotate %8 by %c17_i32 dim 1 : vector<4x256xf32>, i32 -> vector<4x256xf32>
    %c1_i32 = arith.constant 1 : i32
    %12 = vector.broadcast %c1_i32 : i32 to vector<1x256xi32>
    %13 = arith.cmpi sge, %6, %12 : vector<1x256xi32>
    %c1_i32_14 = arith.constant 1 : i32
    %14 = vector.broadcast %c1_i32_14 : i32 to vector<1x256xi32>
    %15 = arith.cmpi sge, %5, %14 : vector<1x256xi32>
    %16 = arith.andi %13, %15 : vector<1x256xi1>
    %cst = arith.constant 0.000000e+00 : f32
    %17 = vector.shape_cast %16 : vector<1x256xi1> to vector<1x256xi1>
    %18 = vector.broadcast %17 : vector<1x256xi1> to vector<4x256xi1>
    %19 = vector.broadcast %cst : f32 to vector<4x256xf32>
    %20 = arith.select %18, %11, %19 : vector<4x256xi1>, vector<4x256xf32>
    %21 = vector.extract_strided_slice %10 {offsets = [0, 0], sizes = [4, 1], strides = [1, 1]} : vector<4x9xf32> to vector<4x1xf32>
    %22 = vector.broadcast %21 : vector<4x1xf32> to vector<4x256xf32>
    %23 = arith.mulf %20, %22 : vector<4x256xf32>
    %c16_i32 = arith.constant 16 : i32
    %24 = tpu.dynamic_rotate %8 by %c16_i32 dim 1 : vector<4x256xf32>, i32 -> vector<4x256xf32>
    %cst_15 = arith.constant 0.000000e+00 : f32
    %25 = vector.shape_cast %15 : vector<1x256xi1> to vector<1x256xi1>
    %26 = vector.broadcast %25 : vector<1x256xi1> to vector<4x256xi1>
    %27 = vector.broadcast %cst_15 : f32 to vector<4x256xf32>
    %28 = arith.select %26, %24, %27 : vector<4x256xi1>, vector<4x256xf32>
    %29 = vector.extract_strided_slice %10 {offsets = [0, 1], sizes = [4, 1], strides = [1, 1]} : vector<4x9xf32> to vector<4x1xf32>
    %30 = vector.broadcast %29 : vector<4x1xf32> to vector<4x256xf32>
    %31 = arith.mulf %28, %30 : vector<4x256xf32>
    %32 = arith.addf %23, %31 : vector<4x256xf32>
    %c15_i32 = arith.constant 15 : i32
    %33 = tpu.dynamic_rotate %8 by %c15_i32 dim 1 : vector<4x256xf32>, i32 -> vector<4x256xf32>
    %c15_i32_16 = arith.constant 15 : i32
    %34 = vector.broadcast %c15_i32_16 : i32 to vector<1x256xi32>
    %35 = arith.cmpi slt, %6, %34 : vector<1x256xi32>
    %36 = arith.andi %35, %15 : vector<1x256xi1>
    %cst_17 = arith.constant 0.000000e+00 : f32
    %37 = vector.shape_cast %36 : vector<1x256xi1> to vector<1x256xi1>
    %38 = vector.broadcast %37 : vector<1x256xi1> to vector<4x256xi1>
    %39 = vector.broadcast %cst_17 : f32 to vector<4x256xf32>
    %40 = arith.select %38, %33, %39 : vector<4x256xi1>, vector<4x256xf32>
    %41 = vector.extract_strided_slice %10 {offsets = [0, 2], sizes = [4, 1], strides = [1, 1]} : vector<4x9xf32> to vector<4x1xf32>
    %42 = vector.broadcast %41 : vector<4x1xf32> to vector<4x256xf32>
    %43 = arith.mulf %40, %42 : vector<4x256xf32>
    %44 = arith.addf %32, %43 : vector<4x256xf32>
    %c1_i32_18 = arith.constant 1 : i32
    %45 = tpu.dynamic_rotate %8 by %c1_i32_18 dim 1 : vector<4x256xf32>, i32 -> vector<4x256xf32>
    %cst_19 = arith.constant 0.000000e+00 : f32
    %46 = vector.shape_cast %13 : vector<1x256xi1> to vector<1x256xi1>
    %47 = vector.broadcast %46 : vector<1x256xi1> to vector<4x256xi1>
    %48 = vector.broadcast %cst_19 : f32 to vector<4x256xf32>
    %49 = arith.select %47, %45, %48 : vector<4x256xi1>, vector<4x256xf32>
    %50 = vector.extract_strided_slice %10 {offsets = [0, 3], sizes = [4, 1], strides = [1, 1]} : vector<4x9xf32> to vector<4x1xf32>
    %51 = vector.broadcast %50 : vector<4x1xf32> to vector<4x256xf32>
    %52 = arith.mulf %49, %51 : vector<4x256xf32>
    %53 = arith.addf %44, %52 : vector<4x256xf32>
    %54 = vector.extract_strided_slice %10 {offsets = [0, 4], sizes = [4, 1], strides = [1, 1]} : vector<4x9xf32> to vector<4x1xf32>
    %55 = vector.broadcast %54 : vector<4x1xf32> to vector<4x256xf32>
    %56 = arith.mulf %8, %55 : vector<4x256xf32>
    %57 = arith.addf %53, %56 : vector<4x256xf32>
    %c255_i32 = arith.constant 255 : i32
    %58 = tpu.dynamic_rotate %8 by %c255_i32 dim 1 : vector<4x256xf32>, i32 -> vector<4x256xf32>
    %cst_20 = arith.constant 0.000000e+00 : f32
    %59 = vector.shape_cast %35 : vector<1x256xi1> to vector<1x256xi1>
    %60 = vector.broadcast %59 : vector<1x256xi1> to vector<4x256xi1>
    %61 = vector.broadcast %cst_20 : f32 to vector<4x256xf32>
    %62 = arith.select %60, %58, %61 : vector<4x256xi1>, vector<4x256xf32>
    %63 = vector.extract_strided_slice %10 {offsets = [0, 5], sizes = [4, 1], strides = [1, 1]} : vector<4x9xf32> to vector<4x1xf32>
    %64 = vector.broadcast %63 : vector<4x1xf32> to vector<4x256xf32>
    %65 = arith.mulf %62, %64 : vector<4x256xf32>
    %66 = arith.addf %57, %65 : vector<4x256xf32>
    %c241_i32 = arith.constant 241 : i32
    %67 = tpu.dynamic_rotate %8 by %c241_i32 dim 1 : vector<4x256xf32>, i32 -> vector<4x256xf32>
    %c15_i32_21 = arith.constant 15 : i32
    %68 = vector.broadcast %c15_i32_21 : i32 to vector<1x256xi32>
    %69 = arith.cmpi slt, %5, %68 : vector<1x256xi32>
    %70 = arith.andi %13, %69 : vector<1x256xi1>
    %cst_22 = arith.constant 0.000000e+00 : f32
    %71 = vector.shape_cast %70 : vector<1x256xi1> to vector<1x256xi1>
    %72 = vector.broadcast %71 : vector<1x256xi1> to vector<4x256xi1>
    %73 = vector.broadcast %cst_22 : f32 to vector<4x256xf32>
    %74 = arith.select %72, %67, %73 : vector<4x256xi1>, vector<4x256xf32>
    %75 = vector.extract_strided_slice %10 {offsets = [0, 6], sizes = [4, 1], strides = [1, 1]} : vector<4x9xf32> to vector<4x1xf32>
    %76 = vector.broadcast %75 : vector<4x1xf32> to vector<4x256xf32>
    %77 = arith.mulf %74, %76 : vector<4x256xf32>
    %78 = arith.addf %66, %77 : vector<4x256xf32>
    %c240_i32 = arith.constant 240 : i32
    %79 = tpu.dynamic_rotate %8 by %c240_i32 dim 1 : vector<4x256xf32>, i32 -> vector<4x256xf32>
    %cst_23 = arith.constant 0.000000e+00 : f32
    %80 = vector.shape_cast %69 : vector<1x256xi1> to vector<1x256xi1>
    %81 = vector.broadcast %80 : vector<1x256xi1> to vector<4x256xi1>
    %82 = vector.broadcast %cst_23 : f32 to vector<4x256xf32>
    %83 = arith.select %81, %79, %82 : vector<4x256xi1>, vector<4x256xf32>
    %84 = vector.extract_strided_slice %10 {offsets = [0, 7], sizes = [4, 1], strides = [1, 1]} : vector<4x9xf32> to vector<4x1xf32>
    %85 = vector.broadcast %84 : vector<4x1xf32> to vector<4x256xf32>
    %86 = arith.mulf %83, %85 : vector<4x256xf32>
    %87 = arith.addf %78, %86 : vector<4x256xf32>
    %c239_i32 = arith.constant 239 : i32
    %88 = tpu.dynamic_rotate %8 by %c239_i32 dim 1 : vector<4x256xf32>, i32 -> vector<4x256xf32>
    %89 = arith.andi %35, %69 : vector<1x256xi1>
    %cst_24 = arith.constant 0.000000e+00 : f32
    %90 = vector.shape_cast %89 : vector<1x256xi1> to vector<1x256xi1>
    %91 = vector.broadcast %90 : vector<1x256xi1> to vector<4x256xi1>
    %92 = vector.broadcast %cst_24 : f32 to vector<4x256xf32>
    %93 = arith.select %91, %88, %92 : vector<4x256xi1>, vector<4x256xf32>
    %94 = vector.extract_strided_slice %10 {offsets = [0, 8], sizes = [4, 1], strides = [1, 1]} : vector<4x9xf32> to vector<4x1xf32>
    %95 = vector.broadcast %94 : vector<4x1xf32> to vector<4x256xf32>
    %96 = arith.mulf %93, %95 : vector<4x256xf32>
    %97 = arith.addf %87, %96 : vector<4x256xf32>
    %c0_25 = arith.constant 0 : index
    %c0_26 = arith.constant 0 : index
    %c0_27 = arith.constant 0 : index
    %98 = vector.load %arg6[%c0_25, %c0_26, %c0_27] : memref<3x4x1xf32, #tpu.memory_space<vmem>>, vector<1x4x1xf32>
    %99 = vector.shape_cast %98 : vector<1x4x1xf32> to vector<4x1xf32>
    %c0_28 = arith.constant 0 : index
    %c0_29 = arith.constant 0 : index
    %c0_30 = arith.constant 0 : index
    %100 = vector.load %arg5[%c0_28, %c0_29, %c0_30] : memref<3x4x4xf32, #tpu.memory_space<vmem>>, vector<1x4x4xf32>
    %101 = vector.shape_cast %100 : vector<1x4x4xf32> to vector<4x4xf32>
    %102 = vector.extract_strided_slice %101 {offsets = [0, 0], sizes = [4, 1], strides = [1, 1]} : vector<4x4xf32> to vector<4x1xf32>
    %103 = vector.extract_strided_slice %97 {offsets = [0, 0], sizes = [1, 256], strides = [1, 1]} : vector<4x256xf32> to vector<1x256xf32>
    %104 = vector.broadcast %102 : vector<4x1xf32> to vector<4x256xf32>
    %105 = vector.broadcast %103 : vector<1x256xf32> to vector<4x256xf32>
    %106 = arith.mulf %104, %105 : vector<4x256xf32>
    %107 = vector.extract_strided_slice %101 {offsets = [0, 1], sizes = [4, 1], strides = [1, 1]} : vector<4x4xf32> to vector<4x1xf32>
    %108 = vector.extract_strided_slice %97 {offsets = [1, 0], sizes = [1, 256], strides = [1, 1]} : vector<4x256xf32> to vector<1x256xf32>
    %109 = vector.broadcast %107 : vector<4x1xf32> to vector<4x256xf32>
    %110 = vector.broadcast %108 : vector<1x256xf32> to vector<4x256xf32>
    %111 = arith.mulf %109, %110 : vector<4x256xf32>
    %112 = arith.addf %106, %111 : vector<4x256xf32>
    %113 = vector.extract_strided_slice %101 {offsets = [0, 2], sizes = [4, 1], strides = [1, 1]} : vector<4x4xf32> to vector<4x1xf32>
    %114 = vector.extract_strided_slice %97 {offsets = [2, 0], sizes = [1, 256], strides = [1, 1]} : vector<4x256xf32> to vector<1x256xf32>
    %115 = vector.broadcast %113 : vector<4x1xf32> to vector<4x256xf32>
    %116 = vector.broadcast %114 : vector<1x256xf32> to vector<4x256xf32>
    %117 = arith.mulf %115, %116 : vector<4x256xf32>
    %118 = arith.addf %112, %117 : vector<4x256xf32>
    %119 = vector.extract_strided_slice %101 {offsets = [0, 3], sizes = [4, 1], strides = [1, 1]} : vector<4x4xf32> to vector<4x1xf32>
    %120 = vector.extract_strided_slice %97 {offsets = [3, 0], sizes = [1, 256], strides = [1, 1]} : vector<4x256xf32> to vector<1x256xf32>
    %121 = vector.broadcast %119 : vector<4x1xf32> to vector<4x256xf32>
    %122 = vector.broadcast %120 : vector<1x256xf32> to vector<4x256xf32>
    %123 = arith.mulf %121, %122 : vector<4x256xf32>
    %124 = arith.addf %118, %123 : vector<4x256xf32>
    %125 = vector.broadcast %99 : vector<4x1xf32> to vector<4x256xf32>
    %126 = arith.addf %124, %125 : vector<4x256xf32>
    %c0_31 = arith.constant 0 : index
    %c4_32 = arith.constant 4 : index
    %c0_33 = arith.constant 0 : index
    %127 = vector.load %arg7[%c0_31, %c4_32, %c0_33] : memref<1x16x256xf32, #tpu.memory_space<vmem>>, vector<1x4x256xf32>
    %128 = vector.shape_cast %127 : vector<1x4x256xf32> to vector<4x256xf32>
    %129 = vector.shape_cast %126 : vector<4x256xf32> to vector<1x4x256xf32>
    tpu.vector_store %arg7[%c0_31, %c4_32, %c0_33], %129 {strides = array<i32>} : memref<1x16x256xf32, #tpu.memory_space<vmem>>, vector<1x4x256xf32>,
    %c0_34 = arith.constant 0 : index
    %c8 = arith.constant 8 : index
    %c0_35 = arith.constant 0 : index
    %130 = vector.load %arg1[%c0_34, %c8, %c0_35] : memref<1x16x256xf32, #tpu.memory_space<vmem>>, vector<1x4x256xf32>
    %131 = vector.shape_cast %130 : vector<1x4x256xf32> to vector<4x256xf32>
    %c1 = arith.constant 1 : index
    %c0_36 = arith.constant 0 : index
    %c0_37 = arith.constant 0 : index
    %132 = vector.load %arg4[%c1, %c0_36, %c0_37] : memref<3x4x9xf32, #tpu.memory_space<vmem>>, vector<1x4x9xf32>
    %133 = vector.shape_cast %132 : vector<1x4x9xf32> to vector<4x9xf32>
    %c4_i32 = arith.constant 4 : i32
    %134 = tpu.dynamic_rotate %131 by %c4_i32 dim 1 : vector<4x256xf32>, i32 -> vector<4x256xf32>
    %c4_i32_38 = arith.constant 4 : i32
    %135 = vector.broadcast %c4_i32_38 : i32 to vector<1x256xi32>
    %136 = arith.cmpi sge, %6, %135 : vector<1x256xi32>
    %cst_39 = arith.constant 0.000000e+00 : f32
    %137 = vector.shape_cast %136 : vector<1x256xi1> to vector<1x256xi1>
    %138 = vector.broadcast %137 : vector<1x256xi1> to vector<4x256xi1>
    %139 = vector.broadcast %cst_39 : f32 to vector<4x256xf32>
    %140 = arith.select %138, %134, %139 : vector<4x256xi1>, vector<4x256xf32>
    %141 = vector.extract_strided_slice %133 {offsets = [0, 0], sizes = [4, 1], strides = [1, 1]} : vector<4x9xf32> to vector<4x1xf32>
    %142 = vector.broadcast %141 : vector<4x1xf32> to vector<4x256xf32>
    %143 = arith.mulf %140, %142 : vector<4x256xf32>
    %c3_i32 = arith.constant 3 : i32
    %144 = tpu.dynamic_rotate %131 by %c3_i32 dim 1 : vector<4x256xf32>, i32 -> vector<4x256xf32>
    %c3_i32_40 = arith.constant 3 : i32
    %145 = vector.broadcast %c3_i32_40 : i32 to vector<1x256xi32>
    %146 = arith.cmpi sge, %6, %145 : vector<1x256xi32>
    %cst_41 = arith.constant 0.000000e+00 : f32
    %147 = vector.shape_cast %146 : vector<1x256xi1> to vector<1x256xi1>
    %148 = vector.broadcast %147 : vector<1x256xi1> to vector<4x256xi1>
    %149 = vector.broadcast %cst_41 : f32 to vector<4x256xf32>
    %150 = arith.select %148, %144, %149 : vector<4x256xi1>, vector<4x256xf32>
    %151 = vector.extract_strided_slice %133 {offsets = [0, 1], sizes = [4, 1], strides = [1, 1]} : vector<4x9xf32> to vector<4x1xf32>
    %152 = vector.broadcast %151 : vector<4x1xf32> to vector<4x256xf32>
    %153 = arith.mulf %150, %152 : vector<4x256xf32>
    %154 = arith.addf %143, %153 : vector<4x256xf32>
    %c2_i32 = arith.constant 2 : i32
    %155 = tpu.dynamic_rotate %131 by %c2_i32 dim 1 : vector<4x256xf32>, i32 -> vector<4x256xf32>
    %c2_i32_42 = arith.constant 2 : i32
    %156 = vector.broadcast %c2_i32_42 : i32 to vector<1x256xi32>
    %157 = arith.cmpi sge, %6, %156 : vector<1x256xi32>
    %cst_43 = arith.constant 0.000000e+00 : f32
    %158 = vector.shape_cast %157 : vector<1x256xi1> to vector<1x256xi1>
    %159 = vector.broadcast %158 : vector<1x256xi1> to vector<4x256xi1>
    %160 = vector.broadcast %cst_43 : f32 to vector<4x256xf32>
    %161 = arith.select %159, %155, %160 : vector<4x256xi1>, vector<4x256xf32>
    %162 = vector.extract_strided_slice %133 {offsets = [0, 2], sizes = [4, 1], strides = [1, 1]} : vector<4x9xf32> to vector<4x1xf32>
    %163 = vector.broadcast %162 : vector<4x1xf32> to vector<4x256xf32>
    %164 = arith.mulf %161, %163 : vector<4x256xf32>
    %165 = arith.addf %154, %164 : vector<4x256xf32>
    %c1_i32_44 = arith.constant 1 : i32
    %166 = tpu.dynamic_rotate %131 by %c1_i32_44 dim 1 : vector<4x256xf32>, i32 -> vector<4x256xf32>
    %cst_45 = arith.constant 0.000000e+00 : f32
    %167 = vector.shape_cast %13 : vector<1x256xi1> to vector<1x256xi1>
    %168 = vector.broadcast %167 : vector<1x256xi1> to vector<4x256xi1>
    %169 = vector.broadcast %cst_45 : f32 to vector<4x256xf32>
    %170 = arith.select %168, %166, %169 : vector<4x256xi1>, vector<4x256xf32>
    %171 = vector.extract_strided_slice %133 {offsets = [0, 3], sizes = [4, 1], strides = [1, 1]} : vector<4x9xf32> to vector<4x1xf32>
    %172 = vector.broadcast %171 : vector<4x1xf32> to vector<4x256xf32>
    %173 = arith.mulf %170, %172 : vector<4x256xf32>
    %174 = arith.addf %165, %173 : vector<4x256xf32>
    %175 = vector.extract_strided_slice %133 {offsets = [0, 4], sizes = [4, 1], strides = [1, 1]} : vector<4x9xf32> to vector<4x1xf32>
    %176 = vector.broadcast %175 : vector<4x1xf32> to vector<4x256xf32>
    %177 = arith.mulf %131, %176 : vector<4x256xf32>
    %178 = arith.addf %174, %177 : vector<4x256xf32>
    %c255_i32_46 = arith.constant 255 : i32
    %179 = tpu.dynamic_rotate %131 by %c255_i32_46 dim 1 : vector<4x256xf32>, i32 -> vector<4x256xf32>
    %cst_47 = arith.constant 0.000000e+00 : f32
    %180 = vector.shape_cast %35 : vector<1x256xi1> to vector<1x256xi1>
    %181 = vector.broadcast %180 : vector<1x256xi1> to vector<4x256xi1>
    %182 = vector.broadcast %cst_47 : f32 to vector<4x256xf32>
    %183 = arith.select %181, %179, %182 : vector<4x256xi1>, vector<4x256xf32>
    %184 = vector.extract_strided_slice %133 {offsets = [0, 5], sizes = [4, 1], strides = [1, 1]} : vector<4x9xf32> to vector<4x1xf32>
    %185 = vector.broadcast %184 : vector<4x1xf32> to vector<4x256xf32>
    %186 = arith.mulf %183, %185 : vector<4x256xf32>
    %187 = arith.addf %178, %186 : vector<4x256xf32>
    %c254_i32 = arith.constant 254 : i32
    %188 = tpu.dynamic_rotate %131 by %c254_i32 dim 1 : vector<4x256xf32>, i32 -> vector<4x256xf32>
    %c14_i32 = arith.constant 14 : i32
    %189 = vector.broadcast %c14_i32 : i32 to vector<1x256xi32>
    %190 = arith.cmpi slt, %6, %189 : vector<1x256xi32>
    %cst_48 = arith.constant 0.000000e+00 : f32
    %191 = vector.shape_cast %190 : vector<1x256xi1> to vector<1x256xi1>
    %192 = vector.broadcast %191 : vector<1x256xi1> to vector<4x256xi1>
    %193 = vector.broadcast %cst_48 : f32 to vector<4x256xf32>
    %194 = arith.select %192, %188, %193 : vector<4x256xi1>, vector<4x256xf32>
    %195 = vector.extract_strided_slice %133 {offsets = [0, 6], sizes = [4, 1], strides = [1, 1]} : vector<4x9xf32> to vector<4x1xf32>
    %196 = vector.broadcast %195 : vector<4x1xf32> to vector<4x256xf32>
    %197 = arith.mulf %194, %196 : vector<4x256xf32>
    %198 = arith.addf %187, %197 : vector<4x256xf32>
    %c253_i32 = arith.constant 253 : i32
    %199 = tpu.dynamic_rotate %131 by %c253_i32 dim 1 : vector<4x256xf32>, i32 -> vector<4x256xf32>
    %c13_i32 = arith.constant 13 : i32
    %200 = vector.broadcast %c13_i32 : i32 to vector<1x256xi32>
    %201 = arith.cmpi slt, %6, %200 : vector<1x256xi32>
    %cst_49 = arith.constant 0.000000e+00 : f32
    %202 = vector.shape_cast %201 : vector<1x256xi1> to vector<1x256xi1>
    %203 = vector.broadcast %202 : vector<1x256xi1> to vector<4x256xi1>
    %204 = vector.broadcast %cst_49 : f32 to vector<4x256xf32>
    %205 = arith.select %203, %199, %204 : vector<4x256xi1>, vector<4x256xf32>
    %206 = vector.extract_strided_slice %133 {offsets = [0, 7], sizes = [4, 1], strides = [1, 1]} : vector<4x9xf32> to vector<4x1xf32>
    %207 = vector.broadcast %206 : vector<4x1xf32> to vector<4x256xf32>
    %208 = arith.mulf %205, %207 : vector<4x256xf32>
    %209 = arith.addf %198, %208 : vector<4x256xf32>
    %c252_i32 = arith.constant 252 : i32
    %210 = tpu.dynamic_rotate %131 by %c252_i32 dim 1 : vector<4x256xf32>, i32 -> vector<4x256xf32>
    %c12_i32 = arith.constant 12 : i32
    %211 = vector.broadcast %c12_i32 : i32 to vector<1x256xi32>
    %212 = arith.cmpi slt, %6, %211 : vector<1x256xi32>
    %cst_50 = arith.constant 0.000000e+00 : f32
    %213 = vector.shape_cast %212 : vector<1x256xi1> to vector<1x256xi1>
    %214 = vector.broadcast %213 : vector<1x256xi1> to vector<4x256xi1>
    %215 = vector.broadcast %cst_50 : f32 to vector<4x256xf32>
    %216 = arith.select %214, %210, %215 : vector<4x256xi1>, vector<4x256xf32>
    %217 = vector.extract_strided_slice %133 {offsets = [0, 8], sizes = [4, 1], strides = [1, 1]} : vector<4x9xf32> to vector<4x1xf32>
    %218 = vector.broadcast %217 : vector<4x1xf32> to vector<4x256xf32>
    %219 = arith.mulf %216, %218 : vector<4x256xf32>
    %220 = arith.addf %209, %219 : vector<4x256xf32>
    %c1_51 = arith.constant 1 : index
    %c0_52 = arith.constant 0 : index
    %c0_53 = arith.constant 0 : index
    %221 = vector.load %arg6[%c1_51, %c0_52, %c0_53] : memref<3x4x1xf32, #tpu.memory_space<vmem>>, vector<1x4x1xf32>
    %222 = vector.shape_cast %221 : vector<1x4x1xf32> to vector<4x1xf32>
    %c1_54 = arith.constant 1 : index
    %c0_55 = arith.constant 0 : index
    %c0_56 = arith.constant 0 : index
    %223 = vector.load %arg5[%c1_54, %c0_55, %c0_56] : memref<3x4x4xf32, #tpu.memory_space<vmem>>, vector<1x4x4xf32>
    %224 = vector.shape_cast %223 : vector<1x4x4xf32> to vector<4x4xf32>
    %225 = vector.extract_strided_slice %224 {offsets = [0, 0], sizes = [4, 1], strides = [1, 1]} : vector<4x4xf32> to vector<4x1xf32>
    %226 = vector.extract_strided_slice %220 {offsets = [0, 0], sizes = [1, 256], strides = [1, 1]} : vector<4x256xf32> to vector<1x256xf32>
    %227 = vector.broadcast %225 : vector<4x1xf32> to vector<4x256xf32>
    %228 = vector.broadcast %226 : vector<1x256xf32> to vector<4x256xf32>
    %229 = arith.mulf %227, %228 : vector<4x256xf32>
    %230 = vector.extract_strided_slice %224 {offsets = [0, 1], sizes = [4, 1], strides = [1, 1]} : vector<4x4xf32> to vector<4x1xf32>
    %231 = vector.extract_strided_slice %220 {offsets = [1, 0], sizes = [1, 256], strides = [1, 1]} : vector<4x256xf32> to vector<1x256xf32>
    %232 = vector.broadcast %230 : vector<4x1xf32> to vector<4x256xf32>
    %233 = vector.broadcast %231 : vector<1x256xf32> to vector<4x256xf32>
    %234 = arith.mulf %232, %233 : vector<4x256xf32>
    %235 = arith.addf %229, %234 : vector<4x256xf32>
    %236 = vector.extract_strided_slice %224 {offsets = [0, 2], sizes = [4, 1], strides = [1, 1]} : vector<4x4xf32> to vector<4x1xf32>
    %237 = vector.extract_strided_slice %220 {offsets = [2, 0], sizes = [1, 256], strides = [1, 1]} : vector<4x256xf32> to vector<1x256xf32>
    %238 = vector.broadcast %236 : vector<4x1xf32> to vector<4x256xf32>
    %239 = vector.broadcast %237 : vector<1x256xf32> to vector<4x256xf32>
    %240 = arith.mulf %238, %239 : vector<4x256xf32>
    %241 = arith.addf %235, %240 : vector<4x256xf32>
    %242 = vector.extract_strided_slice %224 {offsets = [0, 3], sizes = [4, 1], strides = [1, 1]} : vector<4x4xf32> to vector<4x1xf32>
    %243 = vector.extract_strided_slice %220 {offsets = [3, 0], sizes = [1, 256], strides = [1, 1]} : vector<4x256xf32> to vector<1x256xf32>
    %244 = vector.broadcast %242 : vector<4x1xf32> to vector<4x256xf32>
    %245 = vector.broadcast %243 : vector<1x256xf32> to vector<4x256xf32>
    %246 = arith.mulf %244, %245 : vector<4x256xf32>
    %247 = arith.addf %241, %246 : vector<4x256xf32>
    %248 = vector.broadcast %222 : vector<4x1xf32> to vector<4x256xf32>
    %249 = arith.addf %247, %248 : vector<4x256xf32>
    %c0_57 = arith.constant 0 : index
    %c8_58 = arith.constant 8 : index
    %c0_59 = arith.constant 0 : index
    %250 = vector.load %arg7[%c0_57, %c8_58, %c0_59] : memref<1x16x256xf32, #tpu.memory_space<vmem>>, vector<1x4x256xf32>
    %251 = vector.shape_cast %250 : vector<1x4x256xf32> to vector<4x256xf32>
    %252 = vector.shape_cast %249 : vector<4x256xf32> to vector<1x4x256xf32>
    tpu.vector_store %arg7[%c0_57, %c8_58, %c0_59], %252 {strides = array<i32>} : memref<1x16x256xf32, #tpu.memory_space<vmem>>, vector<1x4x256xf32>,
    %c0_60 = arith.constant 0 : index
    %c12 = arith.constant 12 : index
    %c0_61 = arith.constant 0 : index
    %253 = vector.load %arg1[%c0_60, %c12, %c0_61] : memref<1x16x256xf32, #tpu.memory_space<vmem>>, vector<1x4x256xf32>
    %254 = vector.shape_cast %253 : vector<1x4x256xf32> to vector<4x256xf32>
    %c2 = arith.constant 2 : index
    %c0_62 = arith.constant 0 : index
    %c0_63 = arith.constant 0 : index
    %255 = vector.load %arg4[%c2, %c0_62, %c0_63] : memref<3x4x9xf32, #tpu.memory_space<vmem>>, vector<1x4x9xf32>
    %256 = vector.shape_cast %255 : vector<1x4x9xf32> to vector<4x9xf32>
    %c64_i32 = arith.constant 64 : i32
    %257 = tpu.dynamic_rotate %254 by %c64_i32 dim 1 : vector<4x256xf32>, i32 -> vector<4x256xf32>
    %c4_i32_64 = arith.constant 4 : i32
    %258 = vector.broadcast %c4_i32_64 : i32 to vector<1x256xi32>
    %259 = arith.cmpi sge, %5, %258 : vector<1x256xi32>
    %cst_65 = arith.constant 0.000000e+00 : f32
    %260 = vector.shape_cast %259 : vector<1x256xi1> to vector<1x256xi1>
    %261 = vector.broadcast %260 : vector<1x256xi1> to vector<4x256xi1>
    %262 = vector.broadcast %cst_65 : f32 to vector<4x256xf32>
    %263 = arith.select %261, %257, %262 : vector<4x256xi1>, vector<4x256xf32>
    %264 = vector.extract_strided_slice %256 {offsets = [0, 0], sizes = [4, 1], strides = [1, 1]} : vector<4x9xf32> to vector<4x1xf32>
    %265 = vector.broadcast %264 : vector<4x1xf32> to vector<4x256xf32>
    %266 = arith.mulf %263, %265 : vector<4x256xf32>
    %c48_i32 = arith.constant 48 : i32
    %267 = tpu.dynamic_rotate %254 by %c48_i32 dim 1 : vector<4x256xf32>, i32 -> vector<4x256xf32>
    %c3_i32_66 = arith.constant 3 : i32
    %268 = vector.broadcast %c3_i32_66 : i32 to vector<1x256xi32>
    %269 = arith.cmpi sge, %5, %268 : vector<1x256xi32>
    %cst_67 = arith.constant 0.000000e+00 : f32
    %270 = vector.shape_cast %269 : vector<1x256xi1> to vector<1x256xi1>
    %271 = vector.broadcast %270 : vector<1x256xi1> to vector<4x256xi1>
    %272 = vector.broadcast %cst_67 : f32 to vector<4x256xf32>
    %273 = arith.select %271, %267, %272 : vector<4x256xi1>, vector<4x256xf32>
    %274 = vector.extract_strided_slice %256 {offsets = [0, 1], sizes = [4, 1], strides = [1, 1]} : vector<4x9xf32> to vector<4x1xf32>
    %275 = vector.broadcast %274 : vector<4x1xf32> to vector<4x256xf32>
    %276 = arith.mulf %273, %275 : vector<4x256xf32>
    %277 = arith.addf %266, %276 : vector<4x256xf32>
    %c32_i32 = arith.constant 32 : i32
    %278 = tpu.dynamic_rotate %254 by %c32_i32 dim 1 : vector<4x256xf32>, i32 -> vector<4x256xf32>
    %c2_i32_68 = arith.constant 2 : i32
    %279 = vector.broadcast %c2_i32_68 : i32 to vector<1x256xi32>
    %280 = arith.cmpi sge, %5, %279 : vector<1x256xi32>
    %cst_69 = arith.constant 0.000000e+00 : f32
    %281 = vector.shape_cast %280 : vector<1x256xi1> to vector<1x256xi1>
    %282 = vector.broadcast %281 : vector<1x256xi1> to vector<4x256xi1>
    %283 = vector.broadcast %cst_69 : f32 to vector<4x256xf32>
    %284 = arith.select %282, %278, %283 : vector<4x256xi1>, vector<4x256xf32>
    %285 = vector.extract_strided_slice %256 {offsets = [0, 2], sizes = [4, 1], strides = [1, 1]} : vector<4x9xf32> to vector<4x1xf32>
    %286 = vector.broadcast %285 : vector<4x1xf32> to vector<4x256xf32>
    %287 = arith.mulf %284, %286 : vector<4x256xf32>
    %288 = arith.addf %277, %287 : vector<4x256xf32>
    %c16_i32_70 = arith.constant 16 : i32
    %289 = tpu.dynamic_rotate %254 by %c16_i32_70 dim 1 : vector<4x256xf32>, i32 -> vector<4x256xf32>
    %cst_71 = arith.constant 0.000000e+00 : f32
    %290 = vector.shape_cast %15 : vector<1x256xi1> to vector<1x256xi1>
    %291 = vector.broadcast %290 : vector<1x256xi1> to vector<4x256xi1>
    %292 = vector.broadcast %cst_71 : f32 to vector<4x256xf32>
    %293 = arith.select %291, %289, %292 : vector<4x256xi1>, vector<4x256xf32>
    %294 = vector.extract_strided_slice %256 {offsets = [0, 3], sizes = [4, 1], strides = [1, 1]} : vector<4x9xf32> to vector<4x1xf32>
    %295 = vector.broadcast %294 : vector<4x1xf32> to vector<4x256xf32>
    %296 = arith.mulf %293, %295 : vector<4x256xf32>
    %297 = arith.addf %288, %296 : vector<4x256xf32>
    %298 = vector.extract_strided_slice %256 {offsets = [0, 4], sizes = [4, 1], strides = [1, 1]} : vector<4x9xf32> to vector<4x1xf32>
    %299 = vector.broadcast %298 : vector<4x1xf32> to vector<4x256xf32>
    %300 = arith.mulf %254, %299 : vector<4x256xf32>
    %301 = arith.addf %297, %300 : vector<4x256xf32>
    %c240_i32_72 = arith.constant 240 : i32
    %302 = tpu.dynamic_rotate %254 by %c240_i32_72 dim 1 : vector<4x256xf32>, i32 -> vector<4x256xf32>
    %cst_73 = arith.constant 0.000000e+00 : f32
    %303 = vector.shape_cast %69 : vector<1x256xi1> to vector<1x256xi1>
    %304 = vector.broadcast %303 : vector<1x256xi1> to vector<4x256xi1>
    %305 = vector.broadcast %cst_73 : f32 to vector<4x256xf32>
    %306 = arith.select %304, %302, %305 : vector<4x256xi1>, vector<4x256xf32>
    %307 = vector.extract_strided_slice %256 {offsets = [0, 5], sizes = [4, 1], strides = [1, 1]} : vector<4x9xf32> to vector<4x1xf32>
    %308 = vector.broadcast %307 : vector<4x1xf32> to vector<4x256xf32>
    %309 = arith.mulf %306, %308 : vector<4x256xf32>
    %310 = arith.addf %301, %309 : vector<4x256xf32>
    %c224_i32 = arith.constant 224 : i32
    %311 = tpu.dynamic_rotate %254 by %c224_i32 dim 1 : vector<4x256xf32>, i32 -> vector<4x256xf32>
    %c14_i32_74 = arith.constant 14 : i32
    %312 = vector.broadcast %c14_i32_74 : i32 to vector<1x256xi32>
    %313 = arith.cmpi slt, %5, %312 : vector<1x256xi32>
    %cst_75 = arith.constant 0.000000e+00 : f32
    %314 = vector.shape_cast %313 : vector<1x256xi1> to vector<1x256xi1>
    %315 = vector.broadcast %314 : vector<1x256xi1> to vector<4x256xi1>
    %316 = vector.broadcast %cst_75 : f32 to vector<4x256xf32>
    %317 = arith.select %315, %311, %316 : vector<4x256xi1>, vector<4x256xf32>
    %318 = vector.extract_strided_slice %256 {offsets = [0, 6], sizes = [4, 1], strides = [1, 1]} : vector<4x9xf32> to vector<4x1xf32>
    %319 = vector.broadcast %318 : vector<4x1xf32> to vector<4x256xf32>
    %320 = arith.mulf %317, %319 : vector<4x256xf32>
    %321 = arith.addf %310, %320 : vector<4x256xf32>
    %c208_i32 = arith.constant 208 : i32
    %322 = tpu.dynamic_rotate %254 by %c208_i32 dim 1 : vector<4x256xf32>, i32 -> vector<4x256xf32>
    %c13_i32_76 = arith.constant 13 : i32
    %323 = vector.broadcast %c13_i32_76 : i32 to vector<1x256xi32>
    %324 = arith.cmpi slt, %5, %323 : vector<1x256xi32>
    %cst_77 = arith.constant 0.000000e+00 : f32
    %325 = vector.shape_cast %324 : vector<1x256xi1> to vector<1x256xi1>
    %326 = vector.broadcast %325 : vector<1x256xi1> to vector<4x256xi1>
    %327 = vector.broadcast %cst_77 : f32 to vector<4x256xf32>
    %328 = arith.select %326, %322, %327 : vector<4x256xi1>, vector<4x256xf32>
    %329 = vector.extract_strided_slice %256 {offsets = [0, 7], sizes = [4, 1], strides = [1, 1]} : vector<4x9xf32> to vector<4x1xf32>
    %330 = vector.broadcast %329 : vector<4x1xf32> to vector<4x256xf32>
    %331 = arith.mulf %328, %330 : vector<4x256xf32>
    %332 = arith.addf %321, %331 : vector<4x256xf32>
    %c192_i32 = arith.constant 192 : i32
    %333 = tpu.dynamic_rotate %254 by %c192_i32 dim 1 : vector<4x256xf32>, i32 -> vector<4x256xf32>
    %c12_i32_78 = arith.constant 12 : i32
    %334 = vector.broadcast %c12_i32_78 : i32 to vector<1x256xi32>
    %335 = arith.cmpi slt, %5, %334 : vector<1x256xi32>
    %cst_79 = arith.constant 0.000000e+00 : f32
    %336 = vector.shape_cast %335 : vector<1x256xi1> to vector<1x256xi1>
    %337 = vector.broadcast %336 : vector<1x256xi1> to vector<4x256xi1>
    %338 = vector.broadcast %cst_79 : f32 to vector<4x256xf32>
    %339 = arith.select %337, %333, %338 : vector<4x256xi1>, vector<4x256xf32>
    %340 = vector.extract_strided_slice %256 {offsets = [0, 8], sizes = [4, 1], strides = [1, 1]} : vector<4x9xf32> to vector<4x1xf32>
    %341 = vector.broadcast %340 : vector<4x1xf32> to vector<4x256xf32>
    %342 = arith.mulf %339, %341 : vector<4x256xf32>
    %343 = arith.addf %332, %342 : vector<4x256xf32>
    %c2_80 = arith.constant 2 : index
    %c0_81 = arith.constant 0 : index
    %c0_82 = arith.constant 0 : index
    %344 = vector.load %arg6[%c2_80, %c0_81, %c0_82] : memref<3x4x1xf32, #tpu.memory_space<vmem>>, vector<1x4x1xf32>
    %345 = vector.shape_cast %344 : vector<1x4x1xf32> to vector<4x1xf32>
    %c2_83 = arith.constant 2 : index
    %c0_84 = arith.constant 0 : index
    %c0_85 = arith.constant 0 : index
    %346 = vector.load %arg5[%c2_83, %c0_84, %c0_85] : memref<3x4x4xf32, #tpu.memory_space<vmem>>, vector<1x4x4xf32>
    %347 = vector.shape_cast %346 : vector<1x4x4xf32> to vector<4x4xf32>
    %348 = vector.extract_strided_slice %347 {offsets = [0, 0], sizes = [4, 1], strides = [1, 1]} : vector<4x4xf32> to vector<4x1xf32>
    %349 = vector.extract_strided_slice %343 {offsets = [0, 0], sizes = [1, 256], strides = [1, 1]} : vector<4x256xf32> to vector<1x256xf32>
    %350 = vector.broadcast %348 : vector<4x1xf32> to vector<4x256xf32>
    %351 = vector.broadcast %349 : vector<1x256xf32> to vector<4x256xf32>
    %352 = arith.mulf %350, %351 : vector<4x256xf32>
    %353 = vector.extract_strided_slice %347 {offsets = [0, 1], sizes = [4, 1], strides = [1, 1]} : vector<4x4xf32> to vector<4x1xf32>
    %354 = vector.extract_strided_slice %343 {offsets = [1, 0], sizes = [1, 256], strides = [1, 1]} : vector<4x256xf32> to vector<1x256xf32>
    %355 = vector.broadcast %353 : vector<4x1xf32> to vector<4x256xf32>
    %356 = vector.broadcast %354 : vector<1x256xf32> to vector<4x256xf32>
    %357 = arith.mulf %355, %356 : vector<4x256xf32>
    %358 = arith.addf %352, %357 : vector<4x256xf32>
    %359 = vector.extract_strided_slice %347 {offsets = [0, 2], sizes = [4, 1], strides = [1, 1]} : vector<4x4xf32> to vector<4x1xf32>
    %360 = vector.extract_strided_slice %343 {offsets = [2, 0], sizes = [1, 256], strides = [1, 1]} : vector<4x256xf32> to vector<1x256xf32>
    %361 = vector.broadcast %359 : vector<4x1xf32> to vector<4x256xf32>
    %362 = vector.broadcast %360 : vector<1x256xf32> to vector<4x256xf32>
    %363 = arith.mulf %361, %362 : vector<4x256xf32>
    %364 = arith.addf %358, %363 : vector<4x256xf32>
    %365 = vector.extract_strided_slice %347 {offsets = [0, 3], sizes = [4, 1], strides = [1, 1]} : vector<4x4xf32> to vector<4x1xf32>
    %366 = vector.extract_strided_slice %343 {offsets = [3, 0], sizes = [1, 256], strides = [1, 1]} : vector<4x256xf32> to vector<1x256xf32>
    %367 = vector.broadcast %365 : vector<4x1xf32> to vector<4x256xf32>
    %368 = vector.broadcast %366 : vector<1x256xf32> to vector<4x256xf32>
    %369 = arith.mulf %367, %368 : vector<4x256xf32>
    %370 = arith.addf %364, %369 : vector<4x256xf32>
    %371 = vector.broadcast %345 : vector<4x1xf32> to vector<4x256xf32>
    %372 = arith.addf %370, %371 : vector<4x256xf32>
    %c0_86 = arith.constant 0 : index
    %c12_87 = arith.constant 12 : index
    %c0_88 = arith.constant 0 : index
    %373 = vector.load %arg7[%c0_86, %c12_87, %c0_88] : memref<1x16x256xf32, #tpu.memory_space<vmem>>, vector<1x4x256xf32>
    %374 = vector.shape_cast %373 : vector<1x4x256xf32> to vector<4x256xf32>
    %375 = vector.shape_cast %372 : vector<4x256xf32> to vector<1x4x256xf32>
    tpu.vector_store %arg7[%c0_86, %c12_87, %c0_88], %375 {strides = array<i32>} : memref<1x16x256xf32, #tpu.memory_space<vmem>>, vector<1x4x256xf32>,
    return
  }
  func.func @transform_0(%arg0: i32) -> (i32, i32, i32) {
    %c1_i32 = arith.constant 1 : i32
    %c0_i32 = arith.constant 0 : i32
    %c0_i32_0 = arith.constant 0 : i32
    return %arg0, %c1_i32, %c0_i32 : i32, i32, i32
  }
  func.func @transform_1(%arg0: i32) -> (i32, i32) {
    %c0_i32 = arith.constant 0 : i32
    %c0_i32_0 = arith.constant 0 : i32
    %c0_i32_1 = arith.constant 0 : i32
    return %c0_i32, %c0_i32_0 : i32, i32
  }
  func.func @transform_2(%arg0: i32) -> (i32, i32) {
    %c0_i32 = arith.constant 0 : i32
    %c0_i32_0 = arith.constant 0 : i32
    %c0_i32_1 = arith.constant 0 : i32
    return %c0_i32, %c0_i32_0 : i32, i32
  }
  func.func @transform_3(%arg0: i32) -> (i32, i32, i32) {
    %c0_i32 = arith.constant 0 : i32
    %c0_i32_0 = arith.constant 0 : i32
    %c0_i32_1 = arith.constant 0 : i32
    %c0_i32_2 = arith.constant 0 : i32
    return %c0_i32, %c0_i32_0, %c0_i32_1 : i32, i32, i32
  }
  func.func @transform_4(%arg0: i32) -> (i32, i32, i32) {
    %c0_i32 = arith.constant 0 : i32
    %c0_i32_0 = arith.constant 0 : i32
    %c0_i32_1 = arith.constant 0 : i32
    %c0_i32_2 = arith.constant 0 : i32
    return %c0_i32, %c0_i32_0, %c0_i32_1 : i32, i32, i32
  }
  func.func @transform_5(%arg0: i32) -> (i32, i32, i32) {
    %c0_i32 = arith.constant 0 : i32
    %c0_i32_0 = arith.constant 0 : i32
    %c0_i32_1 = arith.constant 0 : i32
    %c0_i32_2 = arith.constant 0 : i32
    return %c0_i32, %c0_i32_0, %c0_i32_1 : i32, i32, i32
  }
  func.func @transform_6(%arg0: i32) -> (i32, i32, i32) {
    %c1_i32 = arith.constant 1 : i32
    %c0_i32 = arith.constant 0 : i32
    %c0_i32_0 = arith.constant 0 : i32
    return %arg0, %c1_i32, %c0_i32 : i32, i32, i32
  }
}

</mosaic_0001>

<llo_original>
// kernel: inception_dwconv2d_lightweight.1
$region0: #{inception_dwconv2d_lightweight.1}
  #allocation0 [shape = 'u32[]', space=smem, size = 0x4, offset = 0x4, fixed_abs, tag = 'smem constant byte address 0x4 - core index']
  #allocation1 [shape = 'u32[144,128]{1,0:T(1,128)}', space=vmem, size = 0x12000, scoped, tag = 'internal scratch']
  %s0 = inlined_call_operand.vmem [shape: f32[2,32,256], index: 0, kind: input, shape index: {}, may-alias: {0,6}]
  %s1 = inlined_call_operand.vmem [shape: s32[1,256], index: 1, kind: input, shape index: {}]
  %s2 = inlined_call_operand.vmem [shape: s32[1,256], index: 2, kind: input, shape index: {}]
  %s3 = inlined_call_operand.vmem [shape: f32[3,4,9], index: 3, kind: input, shape index: {}]
  %s4 = inlined_call_operand.vmem [shape: f32[3,4,4], index: 4, kind: input, shape index: {}]
  %s5 = inlined_call_operand.vmem [shape: f32[3,4,1], index: 5, kind: input, shape index: {}]
  %s6 = inlined_call_operand.vmem [shape: f32[2,32,256], index: 6, kind: output, shape index: {}, may-alias: {0,6}]
  %s7 = sld [smem:[#allocation0]]
  $region57: #{inception_dwconv2d_lightweight.1} parent=0
    _
  %s9 = ssub.s32 1, %s7
  %s10 = scalar_select 0, %s9, %s7
  loop: start=0, step=1, limit=4
  $region2: #{inception_dwconv2d_lightweight.1} parent=0 // loop_pre_header
    _
  $region3: #{inception_dwconv2d_lightweight.1} parent=0 // loop_header
    %s12 = sphi 0, %s16
    %p13 = scmp.ge.s32.totalorder %s12, 4
    %s22 = sphi 0, %s24
    %s25 = sphi 0, %s22
    %s26 = sphi 0, %s25
    %s42 = sphi 0, %s26
    %s46 = sphi 0, %s46
    %s48 = sphi 0, %s46
    %s49 = sphi 0, %s48
    %s63 = sphi 0, %s49
    %s67 = sphi 0, %s67
    %s69 = sphi 0, %s67
    %s70 = sphi 0, %s69
    %s84 = sphi 0, %s70
    %s88 = sphi 0, %s88
    %s90 = sphi 0, %s88
    %s91 = sphi 0, %s90
    %s105 = sphi 0, %s91
    %s109 = sphi 0, %s109
    %s111 = sphi 0, %s109
    %s112 = sphi 0, %s111
    %s126 = sphi 0, %s112
    %s130 = sphi 0, %s130
    %s132 = sphi 0, %s130
    %s133 = sphi 0, %s132
    %s147 = sphi 0, %s133
    %s153 = sphi 0, %s155
    %s156 = sphi 0, %s153
    %s157 = sphi 0, %s156
    %s173 = sphi 0, %s157
  $region4: #{inception_dwconv2d_lightweight.1} parent=0 // loop_header_branch
    %15 = sbr.rel (%p13) target = $region8
  $region5: #{inception_dwconv2d_lightweight.1} parent=0 // loop_body
    %s17 = ssub.s32 %s12, 1
    %s18 = ssub.s32 %s12, 2
    %s19 = sadd.s32 %s12, 1
    %s20 = ssub.s32 %s12, %s19
    %p21 = scmp.eq.s32.totalorder %s20, 0
    %s23 = sadd.s32 %s22, 1
    %s24 = scalar_select %p21, %s22, %s23
    %p27 = pneg %p21
    %p28 = scmp.eq.s32.totalorder %s12, 1
    %p29 = por %p27, %p28
    %p30 = scmp.ne.s32.totalorder %s22, %s25
    %p31 = scmp.eq.s32.totalorder %s12, 0
    %p32 = por %p30, %p31
    %p33 = scmp.ne.s32.totalorder %s22, %s25
    %p34 = scmp.eq.s32.totalorder %s17, 1
    %p35 = por %p33, %p34
    %p36 = scmp.ne.s32.totalorder %s25, %s26
    %p37 = scmp.eq.s32.totalorder %s17, 0
    %p38 = por %p36, %p37
    %p39 = scmp.ne.s32.totalorder %s25, %s26
    %p40 = scmp.eq.s32.totalorder %s18, 1
    %p41 = por %p39, %p40
    %p43 = scmp.ne.s32.totalorder %s26, %s42
    %p44 = scmp.eq.s32.totalorder %s18, 0
    %p45 = por %p43, %p44
    %s47 = sadd.s32 %s46, 1
    %p50 = scmp.eq.s32.totalorder %s12, 1
    %p51 = scmp.ne.s32.totalorder %s46, %s48
    %p52 = scmp.eq.s32.totalorder %s12, 0
    %p53 = por %p51, %p52
    %p54 = scmp.ne.s32.totalorder %s46, %s48
    %p55 = scmp.eq.s32.totalorder %s17, 1
    %p56 = por %p54, %p55
    %p57 = scmp.ne.s32.totalorder %s48, %s49
    %p58 = scmp.eq.s32.totalorder %s17, 0
    %p59 = por %p57, %p58
    %p60 = scmp.ne.s32.totalorder %s48, %s49
    %p61 = scmp.eq.s32.totalorder %s18, 1
    %p62 = por %p60, %p61
    %p64 = scmp.ne.s32.totalorder %s49, %s63
    %p65 = scmp.eq.s32.totalorder %s18, 0
    %p66 = por %p64, %p65
    %s68 = sadd.s32 %s67, 1
    %p71 = scmp.eq.s32.totalorder %s12, 1
    %p72 = scmp.ne.s32.totalorder %s67, %s69
    %p73 = scmp.eq.s32.totalorder %s12, 0
    %p74 = por %p72, %p73
    %p75 = scmp.ne.s32.totalorder %s67, %s69
    %p76 = scmp.eq.s32.totalorder %s17, 1
    %p77 = por %p75, %p76
    %p78 = scmp.ne.s32.totalorder %s69, %s70
    %p79 = scmp.eq.s32.totalorder %s17, 0
    %p80 = por %p78, %p79
    %p81 = scmp.ne.s32.totalorder %s69, %s70
    %p82 = scmp.eq.s32.totalorder %s18, 1
    %p83 = por %p81, %p82
    %p85 = scmp.ne.s32.totalorder %s70, %s84
    %p86 = scmp.eq.s32.totalorder %s18, 0
    %p87 = por %p85, %p86
    %s89 = sadd.s32 %s88, 1
    %p92 = scmp.eq.s32.totalorder %s12, 1
    %p93 = scmp.ne.s32.totalorder %s88, %s90
    %p94 = scmp.eq.s32.totalorder %s12, 0
    %p95 = por %p93, %p94
    %p96 = scmp.ne.s32.totalorder %s88, %s90
    %p97 = scmp.eq.s32.totalorder %s17, 1
    %p98 = por %p96, %p97
    %p99 = scmp.ne.s32.totalorder %s90, %s91
    %p100 = scmp.eq.s32.totalorder %s17, 0
    %p101 = por %p99, %p100
    %p102 = scmp.ne.s32.totalorder %s90, %s91
    %p103 = scmp.eq.s32.totalorder %s18, 1
    %p104 = por %p102, %p103
    %p106 = scmp.ne.s32.totalorder %s91, %s105
    %p107 = scmp.eq.s32.totalorder %s18, 0
    %p108 = por %p106, %p107
    %s110 = sadd.s32 %s109, 1
    %p113 = scmp.eq.s32.totalorder %s12, 1
    %p114 = scmp.ne.s32.totalorder %s109, %s111
    %p115 = scmp.eq.s32.totalorder %s12, 0
    %p116 = por %p114, %p115
    %p117 = scmp.ne.s32.totalorder %s109, %s111
    %p118 = scmp.eq.s32.totalorder %s17, 1
    %p119 = por %p117, %p118
    %p120 = scmp.ne.s32.totalorder %s111, %s112
    %p121 = scmp.eq.s32.totalorder %s17, 0
    %p122 = por %p120, %p121
    %p123 = scmp.ne.s32.totalorder %s111, %s112
    %p124 = scmp.eq.s32.totalorder %s18, 1
    %p125 = por %p123, %p124
    %p127 = scmp.ne.s32.totalorder %s112, %s126
    %p128 = scmp.eq.s32.totalorder %s18, 0
    %p129 = por %p127, %p128
    %s131 = sadd.s32 %s130, 1
    %p134 = scmp.eq.s32.totalorder %s12, 1
    %p135 = scmp.ne.s32.totalorder %s130, %s132
    %p136 = scmp.eq.s32.totalorder %s12, 0
    %p137 = por %p135, %p136
    %p138 = scmp.ne.s32.totalorder %s130, %s132
    %p139 = scmp.eq.s32.totalorder %s17, 1
    %p140 = por %p138, %p139
    %p141 = scmp.ne.s32.totalorder %s132, %s133
    %p142 = scmp.eq.s32.totalorder %s17, 0
    %p143 = por %p141, %p142
    %p144 = scmp.ne.s32.totalorder %s132, %s133
    %p145 = scmp.eq.s32.totalorder %s18, 1
    %p146 = por %p144, %p145
    %p148 = scmp.ne.s32.totalorder %s133, %s147
    %p149 = scmp.eq.s32.totalorder %s18, 0
    %p150 = por %p148, %p149
    %s151 = ssub.s32 %s12, %s19
    %p152 = scmp.eq.s32.totalorder %s151, 0
    %s154 = sadd.s32 %s153, 1
    %s155 = scalar_select %p152, %s153, %s154
    %p158 = pneg %p152
    %p159 = scmp.eq.s32.totalorder %s12, 1
    %p160 = por %p158, %p159
    %p161 = scmp.ne.s32.totalorder %s153, %s156
    %p162 = scmp.eq.s32.totalorder %s12, 0
    %p163 = por %p161, %p162
    %p164 = scmp.ne.s32.totalorder %s153, %s156
    %p165 = scmp.eq.s32.totalorder %s17, 1
    %p166 = por %p164, %p165
    %p167 = scmp.ne.s32.totalorder %s156, %s157
    %p168 = scmp.eq.s32.totalorder %s17, 0
    %p169 = por %p167, %p168
    %p170 = scmp.ne.s32.totalorder %s156, %s157
    %p171 = scmp.eq.s32.totalorder %s18, 1
    %p172 = por %p170, %p171
    %p174 = scmp.ne.s32.totalorder %s157, %s173
    %p175 = scmp.eq.s32.totalorder %s18, 0
    %p176 = por %p174, %p175
    %p177 = scmp.le.s32.totalorder 1, %s12
    %p178 = scmp.lt.s32.totalorder %s12, 3
    %p179 = pnand %p177, %p178
    %p180 = pneg %p179
    // Predicated region
    $region9: #{inception_dwconv2d_lightweight.1} parent=5 // pred_check
      _
    $region10: #{inception_dwconv2d_lightweight.1} parent=5 // pred_check_branch
      %182 = sbr.rel (%p179) target = $region12
    $region11: #{inception_dwconv2d_lightweight.1} parent=5 // pred_region
      %s183 = ssub.s32 %s12, 1
      // Predicated region
      $region13: #{inception_dwconv2d_lightweight.1} parent=11 // pred_check
        %p184 = pneg %p59
      $region14: #{inception_dwconv2d_lightweight.1} parent=11 // pred_check_branch
        %186 = sbr.rel (%p184) target = $region16
      $region15: #{inception_dwconv2d_lightweight.1} parent=11 // pred_region
        _
      $region16: #{inception_dwconv2d_lightweight.1} parent=11 // pred_fallthru
        _
      // Predicated region
      $region17: #{inception_dwconv2d_lightweight.1} parent=11 // pred_check
        %p187 = pneg %p80
      $region18: #{inception_dwconv2d_lightweight.1} parent=11 // pred_check_branch
        %189 = sbr.rel (%p187) target = $region20
      $region19: #{inception_dwconv2d_lightweight.1} parent=11 // pred_region
        _
      $region20: #{inception_dwconv2d_lightweight.1} parent=11 // pred_fallthru
        _
      // Predicated region
      $region21: #{inception_dwconv2d_lightweight.1} parent=11 // pred_check
        %p190 = pneg %p101
      $region22: #{inception_dwconv2d_lightweight.1} parent=11 // pred_check_branch
        %192 = sbr.rel (%p190) target = $region24
      $region23: #{inception_dwconv2d_lightweight.1} parent=11 // pred_region
        _
      $region24: #{inception_dwconv2d_lightweight.1} parent=11 // pred_fallthru
        _
      // Predicated region
      $region25: #{inception_dwconv2d_lightweight.1} parent=11 // pred_check
        %p193 = pneg %p122
      $region26: #{inception_dwconv2d_lightweight.1} parent=11 // pred_check_branch
        %195 = sbr.rel (%p193) target = $region28
      $region27: #{inception_dwconv2d_lightweight.1} parent=11 // pred_region
        _
      $region28: #{inception_dwconv2d_lightweight.1} parent=11 // pred_fallthru
        _
      // Predicated region
      $region29: #{inception_dwconv2d_lightweight.1} parent=11 // pred_check
        %p196 = pneg %p143
      $region30: #{inception_dwconv2d_lightweight.1} parent=11 // pred_check_branch
        %198 = sbr.rel (%p196) target = $region32
      $region31: #{inception_dwconv2d_lightweight.1} parent=11 // pred_region
        _
      $region32: #{inception_dwconv2d_lightweight.1} parent=11 // pred_fallthru
        _
    $region12: #{inception_dwconv2d_lightweight.1} parent=5 // pred_fallthru
      _
    %p199 = scmp.lt.s32.totalorder %s12, 2
    // Predicated region
    $region33: #{inception_dwconv2d_lightweight.1} parent=5 // pred_check
      %p200 = pneg %p199
    $region34: #{inception_dwconv2d_lightweight.1} parent=5 // pred_check_branch
      %202 = sbr.rel (%p200) target = $region36
    $region35: #{inception_dwconv2d_lightweight.1} parent=5 // pred_region
      // Predicated region
      $region37: #{inception_dwconv2d_lightweight.1} parent=35 // pred_check
        %p203 = pneg %p32
      $region38: #{inception_dwconv2d_lightweight.1} parent=35 // pred_check_branch
        %205 = sbr.rel (%p203) target = $region40
      $region39: #{inception_dwconv2d_lightweight.1} parent=35 // pred_region
        %p206 = scmp.lt.s32.totalorder %s12, 1
        %s207 = scalar_select %p206, %s12, 1
        %s208 = smul.addr %s207, 8
        %s209 = sadd.s32 4, %s208
        %s210 = smul.addr %s209, 8
        %s211 = scalar_lea.vmem %s0, %s210
      $region40: #{inception_dwconv2d_lightweight.1} parent=35 // pred_fallthru
        _
    $region36: #{inception_dwconv2d_lightweight.1} parent=5 // pred_fallthru
      _
    %p212 = scmp.le.s32.totalorder 1, %s12
    %p213 = scmp.lt.s32.totalorder %s12, 3
    %p214 = pnand %p212, %p213
    %p215 = pneg %p214
    // Predicated region
    $region41: #{inception_dwconv2d_lightweight.1} parent=5 // pred_check
      _
    $region42: #{inception_dwconv2d_lightweight.1} parent=5 // pred_check_branch
      %217 = sbr.rel (%p214) target = $region44
    $region43: #{inception_dwconv2d_lightweight.1} parent=5 // pred_region
      %s218 = ssub.s32 %s12, 1
      %p219 = scmp.lt.s32.totalorder %s17, 1
      %s220 = scalar_select %p219, %s17, 1
      %s221 = smul.addr %s220, 8
      %s222 = sadd.s32 4, %s221
      %s223 = smul.addr %s222, 8
      %s224 = scalar_lea.vmem %s0, %s223
      %p225 = pneg %p38
      %p226 = pneg %p35
      %p227 = pneg %p59
      %p228 = pneg %p56
      %p229 = pneg %p80
      %p230 = pneg %p77
      %p231 = pneg %p101
      %p232 = pneg %p98
      %p233 = pneg %p122
      %p234 = pneg %p119
      %p235 = pneg %p143
      %p236 = pneg %p140
      %p237 = pneg %p169
      %p238 = pneg %p166
      %p239 = scmp.lt.s32.totalorder %s17, 1
      %s240 = scalar_select %p239, %s17, 1
      %s241 = smul.addr %s240, 8
      %s242 = sadd.s32 4, %s241
      %s243 = smul.addr %s242, 8
      %s244 = scalar_lea.vmem %s6, %s243
      %p245 = scmp.lt.s32.totalorder %s17, 1
      %s246 = scalar_select %p245, %s17, 1
      %s247 = smul.addr %s246, 8
      %s248 = sadd.s32 4, %s247
      %s249 = smul.addr %s248, 8
      %s250 = scalar_lea.vmem %s0, %s249
      %p251 = scmp.lt.s32.totalorder %s17, 1
      %s252 = scalar_select %p251, %s17, 1
      %s253 = smul.addr %s252, 8
      %s254 = sadd.s32 4, %s253
      %s255 = smul.addr %s254, 8
      %s256 = scalar_lea.vmem %s6, %s255
      %v257 = vld [vmem:[%s250] sm:$0xf]
      %v258 = vld [vmem:[%s250 + $0x8] sm:$0xf]
      %259 = vst [vmem:[%s256] sm:$0xf] %v257
      %260 = vst [vmem:[%s256 + $0x8] sm:$0xf] %v258
      %v261 = vld [vmem:[%s1] sm:$0x3]
      %v262 = vld [vmem:[%s2] sm:$0x3]
      %v263 = vld [vmem:[%s250] sm:$0xf0]
      %v264 = vld [vmem:[%s250 + $0x8] sm:$0xf0]
      %v265 = vld [vmem:[%s3] sm:$0xf]
      %v268 = vrot.slane %v263, 4
      %v269 = vrot.slane %v264, 4
      %272 = vrot.lane.b32.xlu0 %v268, 17
      %v273 = vpop.permute.xlu0 %272
      %274 = vrot.lane.b32.xlu0 %v269, 17
      %v275 = vpop.permute.xlu0 %274
      %v276 = vlaneseq
      %v277 = vand.u32 %v276, 127
      %vm278 = vcmp.lt.s32.totalorder %v277, 17
      %v279 = vsel %vm278, %v273, %v275
      %v280 = vsel %vm278, %v275, %v273
      %vm281 = vcmp.ge.s32.totalorder %v262, 1
      %vm282 = vcmp.ge.s32.totalorder %v261, 1
      %vm283 = vmand %vm281, %vm282
      %v284 = vsel %vm283, 1, 0
      %v285 = vlaneseq
      %v286 = vshrl.u32 %v285, 7
      %v287 = vsub.s32 0, %v286
      %v288 = vrot.slane %v284, %v287
      %v289 = vlaneseq
      %v290 = vshrl.u32 %v289, 7
      %v291 = vsub.s32 1, %v290
      %v292 = vrot.slane %v284, %v291
      %vm293 = vcmp.eq.s32.totalorder %v288, 1
      %vm294 = vcmp.eq.s32.totalorder %v292, 1
      %v295 = vsel %vm293, %v280, 0.0
      %v296 = vsel %vm294, %v279, 0.0
      %298 = vset.pattern.permute.xlu0 0
      %299 = vperm.xlu0 %298, %v265
      %v300 = vpop.permute.xlu0 %299
      %v302 = vmul.f32 %v295, %v300
      %v303 = vmul.f32 %v296, %v300
      %304 = vrot.lane.b32.xlu0 %v268, 16
      %v305 = vpop.permute.xlu0 %304
      %306 = vrot.lane.b32.xlu0 %v269, 16
      %v307 = vpop.permute.xlu0 %306
      %vm308 = vcmp.lt.s32.totalorder %v277, 16
      %v309 = vsel %vm308, %v305, %v307
      %v310 = vsel %vm308, %v307, %v305
      %v311 = vsel %vm282, 1, 0
      %v312 = vlaneseq
      %v313 = vshrl.u32 %v312, 7
      %v314 = vsub.s32 0, %v313
      %v315 = vrot.slane %v311, %v314
      %v316 = vlaneseq
      %v317 = vshrl.u32 %v316, 7
      %v318 = vsub.s32 1, %v317
      %v319 = vrot.slane %v311, %v318
      %vm320 = vcmp.eq.s32.totalorder %v315, 1
      %vm321 = vcmp.eq.s32.totalorder %v319, 1
      %v322 = vsel %vm320, %v310, 0.0
      %v323 = vsel %vm321, %v309, 0.0
      %324 = vset.pattern.permute.xlu0 1
      %325 = vperm.xlu0 %324, %v265
      %v326 = vpop.permute.xlu0 %325
      %v328 = vmul.f32 %v322, %v326
      %v329 = vmul.f32 %v323, %v326
      %v330 = vadd.f32 %v302, %v328
      %v331 = vadd.f32 %v303, %v329
      %332 = vrot.lane.b32.xlu0 %v268, 15
      %v333 = vpop.permute.xlu0 %332
      %334 = vrot.lane.b32.xlu0 %v269, 15
      %v335 = vpop.permute.xlu0 %334
      %vm336 = vcmp.lt.s32.totalorder %v277, 15
      %v337 = vsel %vm336, %v333, %v335
      %v338 = vsel %vm336, %v335, %v333
      %vm339 = vcmp.lt.s32.totalorder %v262, 15
      %vm340 = vmand %vm339, %vm282
      %v341 = vsel %vm340, 1, 0
      %v342 = vlaneseq
      %v343 = vshrl.u32 %v342, 7
      %v344 = vsub.s32 0, %v343
      %v345 = vrot.slane %v341, %v344
      %v346 = vlaneseq
      %v347 = vshrl.u32 %v346, 7
      %v348 = vsub.s32 1, %v347
      %v349 = vrot.slane %v341, %v348
      %vm350 = vcmp.eq.s32.totalorder %v345, 1
      %vm351 = vcmp.eq.s32.totalorder %v349, 1
      %v352 = vsel %vm350, %v338, 0.0
      %v353 = vsel %vm351, %v337, 0.0
      %354 = vset.pattern.permute.xlu0 2
      %355 = vperm.xlu0 %354, %v265
      %v356 = vpop.permute.xlu0 %355
      %v358 = vmul.f32 %v352, %v356
      %v359 = vmul.f32 %v353, %v356
      %v360 = vadd.f32 %v330, %v358
      %v361 = vadd.f32 %v331, %v359
      %362 = vrot.lane.b32.xlu0 %v268, 1
      %v363 = vpop.permute.xlu0 %362
      %364 = vrot.lane.b32.xlu0 %v269, 1
      %v365 = vpop.permute.xlu0 %364
      %vm366 = vcmp.lt.s32.totalorder %v277, 1
      %v367 = vsel %vm366, %v363, %v365
      %v368 = vsel %vm366, %v365, %v363
      %v369 = vsel %vm281, 1, 0
      %v370 = vlaneseq
      %v371 = vshrl.u32 %v370, 7
      %v372 = vsub.s32 0, %v371
      %v373 = vrot.slane %v369, %v372
      %v374 = vlaneseq
      %v375 = vshrl.u32 %v374, 7
      %v376 = vsub.s32 1, %v375
      %v377 = vrot.slane %v369, %v376
      %vm378 = vcmp.eq.s32.totalorder %v373, 1
      %vm379 = vcmp.eq.s32.totalorder %v377, 1
      %v380 = vsel %vm378, %v368, 0.0
      %v381 = vsel %vm379, %v367, 0.0
      %382 = vset.pattern.permute.xlu0 3
      %383 = vperm.xlu0 %382, %v265
      %v384 = vpop.permute.xlu0 %383
      %v386 = vmul.f32 %v380, %v384
      %v387 = vmul.f32 %v381, %v384
      %v388 = vadd.f32 %v360, %v386
      %v389 = vadd.f32 %v361, %v387
      %390 = vset.pattern.permute.xlu0 4
      %391 = vperm.xlu0 %390, %v265
      %v392 = vpop.permute.xlu0 %391
      %v393 = vrot.slane %v392, 4
      %v395 = vmul.f32 %v263, %v393
      %v396 = vmul.f32 %v264, %v393
      %v399 = vrot.slane %v395, 4
      %v400 = vrot.slane %v396, 4
      %v403 = vadd.f32 %v388, %v399
      %v404 = vadd.f32 %v389, %v400
      %405 = vrot.lane.b32.xlu0 %v268, 127
      %v406 = vpop.permute.xlu0 %405
      %407 = vrot.lane.b32.xlu0 %v269, 127
      %v408 = vpop.permute.xlu0 %407
      %vm409 = vcmp.lt.s32.totalorder %v277, 127
      %v410 = vsel %vm409, %v406, %v408
      %v411 = vsel %vm409, %v408, %v406
      %v412 = vsel %vm339, 1, 0
      %v413 = vlaneseq
      %v414 = vshrl.u32 %v413, 7
      %v415 = vsub.s32 0, %v414
      %v416 = vrot.slane %v412, %v415
      %v417 = vlaneseq
      %v418 = vshrl.u32 %v417, 7
      %v419 = vsub.s32 1, %v418
      %v420 = vrot.slane %v412, %v419
      %vm421 = vcmp.eq.s32.totalorder %v416, 1
      %vm422 = vcmp.eq.s32.totalorder %v420, 1
      %v423 = vsel %vm421, %v410, 0.0
      %v424 = vsel %vm422, %v411, 0.0
      %425 = vset.pattern.permute.xlu0 5
      %426 = vperm.xlu0 %425, %v265
      %v427 = vpop.permute.xlu0 %426
      %v429 = vmul.f32 %v423, %v427
      %v430 = vmul.f32 %v424, %v427
      %v431 = vadd.f32 %v403, %v429
      %v432 = vadd.f32 %v404, %v430
      %433 = vrot.lane.b32.xlu0 %v268, 113
      %v434 = vpop.permute.xlu0 %433
      %435 = vrot.lane.b32.xlu0 %v269, 113
      %v436 = vpop.permute.xlu0 %435
      %vm437 = vcmp.lt.s32.totalorder %v277, 113
      %v438 = vsel %vm437, %v434, %v436
      %v439 = vsel %vm437, %v436, %v434
      %vm440 = vcmp.lt.s32.totalorder %v261, 15
      %vm441 = vmand %vm281, %vm440
      %v442 = vsel %vm441, 1, 0
      %v443 = vlaneseq
      %v444 = vshrl.u32 %v443, 7
      %v445 = vsub.s32 0, %v444
      %v446 = vrot.slane %v442, %v445
      %v447 = vlaneseq
      %v448 = vshrl.u32 %v447, 7
      %v449 = vsub.s32 1, %v448
      %v450 = vrot.slane %v442, %v449
      %vm451 = vcmp.eq.s32.totalorder %v446, 1
      %vm452 = vcmp.eq.s32.totalorder %v450, 1
      %v453 = vsel %vm451, %v438, 0.0
      %v454 = vsel %vm452, %v439, 0.0
      %455 = vset.pattern.permute.xlu0 6
      %456 = vperm.xlu0 %455, %v265
      %v457 = vpop.permute.xlu0 %456
      %v459 = vmul.f32 %v453, %v457
      %v460 = vmul.f32 %v454, %v457
      %v461 = vadd.f32 %v431, %v459
      %v462 = vadd.f32 %v432, %v460
      %463 = vrot.lane.b32.xlu0 %v268, 112
      %v464 = vpop.permute.xlu0 %463
      %465 = vrot.lane.b32.xlu0 %v269, 112
      %v466 = vpop.permute.xlu0 %465
      %vm467 = vcmp.lt.s32.totalorder %v277, 112
      %v468 = vsel %vm467, %v464, %v466
      %v469 = vsel %vm467, %v466, %v464
      %v470 = vsel %vm440, 1, 0
      %v471 = vlaneseq
      %v472 = vshrl.u32 %v471, 7
      %v473 = vsub.s32 0, %v472
      %v474 = vrot.slane %v470, %v473
      %v475 = vlaneseq
      %v476 = vshrl.u32 %v475, 7
      %v477 = vsub.s32 1, %v476
      %v478 = vrot.slane %v470, %v477
      %vm479 = vcmp.eq.s32.totalorder %v474, 1
      %vm480 = vcmp.eq.s32.totalorder %v478, 1
      %v481 = vsel %vm479, %v468, 0.0
      %v482 = vsel %vm480, %v469, 0.0
      %483 = vset.pattern.permute.xlu0 7
      %484 = vperm.xlu0 %483, %v265
      %v485 = vpop.permute.xlu0 %484
      %v487 = vmul.f32 %v481, %v485
      %v488 = vmul.f32 %v482, %v485
      %v489 = vadd.f32 %v461, %v487
      %v490 = vadd.f32 %v462, %v488
      %491 = vrot.lane.b32.xlu0 %v268, 111
      %v492 = vpop.permute.xlu0 %491
      %493 = vrot.lane.b32.xlu0 %v269, 111
      %v494 = vpop.permute.xlu0 %493
      %vm495 = vcmp.lt.s32.totalorder %v277, 111
      %v496 = vsel %vm495, %v492, %v494
      %v497 = vsel %vm495, %v494, %v492
      %vm498 = vmand %vm339, %vm440
      %v499 = vsel %vm498, 1, 0
      %v500 = vlaneseq
      %v501 = vshrl.u32 %v500, 7
      %v502 = vsub.s32 0, %v501
      %v503 = vrot.slane %v499, %v502
      %v504 = vlaneseq
      %v505 = vshrl.u32 %v504, 7
      %v506 = vsub.s32 1, %v505
      %v507 = vrot.slane %v499, %v506
      %vm508 = vcmp.eq.s32.totalorder %v503, 1
      %vm509 = vcmp.eq.s32.totalorder %v507, 1
      %v510 = vsel %vm508, %v496, 0.0
      %v511 = vsel %vm509, %v497, 0.0
      %512 = vset.pattern.permute.xlu0 8
      %513 = vperm.xlu0 %512, %v265
      %v514 = vpop.permute.xlu0 %513
      %v516 = vmul.f32 %v510, %v514
      %v517 = vmul.f32 %v511, %v514
      %v518 = vadd.f32 %v489, %v516
      %v519 = vadd.f32 %v490, %v517
      %v520 = vld [vmem:[%s5] sm:$0xf]
      %v521 = vld [vmem:[%s4] sm:$0xf]
      %523 = vset.pattern.permute.xlu0 0
      %524 = vperm.xlu0 %523, %v521
      %v525 = vpop.permute.xlu0 %524
      %v527 = vlaneseq
      %v528 = vshrl.u32 %v527, 7
      %v529 = vsub.s32 0, %v528
      %v530 = vrot.slane %v518, %v529
      %v531 = vlaneseq
      %v532 = vshrl.u32 %v531, 7
      %v533 = vsub.s32 0, %v532
      %v534 = vrot.slane %v519, %v533
      %v535 = vmul.f32 %v525, %v530
      %v536 = vmul.f32 %v525, %v534
      %537 = vset.pattern.permute.xlu0 1
      %538 = vperm.xlu0 %537, %v521
      %v539 = vpop.permute.xlu0 %538
      %v541 = vlaneseq
      %v542 = vshrl.u32 %v541, 7
      %v543 = vsub.s32 1, %v542
      %v544 = vrot.slane %v518, %v543
      %v545 = vlaneseq
      %v546 = vshrl.u32 %v545, 7
      %v547 = vsub.s32 1, %v546
      %v548 = vrot.slane %v519, %v547
      %v549 = vmul.f32 %v539, %v544
      %v550 = vmul.f32 %v539, %v548
      %v551 = vadd.f32 %v535, %v549
      %v552 = vadd.f32 %v536, %v550
      %553 = vset.pattern.permute.xlu0 2
      %554 = vperm.xlu0 %553, %v521
      %v555 = vpop.permute.xlu0 %554
      %v557 = vlaneseq
      %v558 = vshrl.u32 %v557, 7
      %v559 = vsub.s32 2, %v558
      %v560 = vrot.slane %v518, %v559
      %v561 = vlaneseq
      %v562 = vshrl.u32 %v561, 7
      %v563 = vsub.s32 2, %v562
      %v564 = vrot.slane %v519, %v563
      %v565 = vmul.f32 %v555, %v560
      %v566 = vmul.f32 %v555, %v564
      %v567 = vadd.f32 %v551, %v565
      %v568 = vadd.f32 %v552, %v566
      %569 = vset.pattern.permute.xlu0 3
      %570 = vperm.xlu0 %569, %v521
      %v571 = vpop.permute.xlu0 %570
      %v573 = vlaneseq
      %v574 = vshrl.u32 %v573, 7
      %v575 = vsub.s32 3, %v574
      %v576 = vrot.slane %v518, %v575
      %v577 = vlaneseq
      %v578 = vshrl.u32 %v577, 7
      %v579 = vsub.s32 3, %v578
      %v580 = vrot.slane %v519, %v579
      %v581 = vmul.f32 %v571, %v576
      %v582 = vmul.f32 %v571, %v580
      %v583 = vadd.f32 %v567, %v581
      %v584 = vadd.f32 %v568, %v582
      %586 = vset.pattern.permute.xlu0 0
      %587 = vperm.xlu0 %586, %v520
      %v588 = vpop.permute.xlu0 %587
      %v590 = vadd.f32 %v583, %v588
      %v591 = vadd.f32 %v584, %v588
      %v594 = vrot.slane %v590, 4
      %v595 = vrot.slane %v591, 4
      %598 = vst [vmem:[%s256] sm:$0xf0] %v594
      %599 = vst [vmem:[%s256 + $0x8] sm:$0xf0] %v595
      %v600 = vld [vmem:[%s250 + $0x10] sm:$0xf]
      %v601 = vld [vmem:[%s250 + $0x18] sm:$0xf]
      %s602 = scalar_lea.vmem %s3, 4
      %v603 = vld [vmem:[%s602] sm:$0xf]
      %604 = vrot.lane.b32.xlu0 %v600, 4
      %v605 = vpop.permute.xlu0 %604
      %606 = vrot.lane.b32.xlu0 %v601, 4
      %v607 = vpop.permute.xlu0 %606
      %vm608 = vcmp.lt.s32.totalorder %v277, 4
      %v609 = vsel %vm608, %v605, %v607
      %v610 = vsel %vm608, %v607, %v605
      %vm611 = vcmp.ge.s32.totalorder %v262, 4
      %v612 = vsel %vm611, 1, 0
      %v613 = vlaneseq
      %v614 = vshrl.u32 %v613, 7
      %v615 = vsub.s32 0, %v614
      %v616 = vrot.slane %v612, %v615
      %v617 = vlaneseq
      %v618 = vshrl.u32 %v617, 7
      %v619 = vsub.s32 1, %v618
      %v620 = vrot.slane %v612, %v619
      %vm621 = vcmp.eq.s32.totalorder %v616, 1
      %vm622 = vcmp.eq.s32.totalorder %v620, 1
      %v623 = vsel %vm621, %v610, 0.0
      %v624 = vsel %vm622, %v609, 0.0
      %626 = vset.pattern.permute.xlu0 0
      %627 = vperm.xlu0 %626, %v603
      %v628 = vpop.permute.xlu0 %627
      %v630 = vmul.f32 %v623, %v628
      %v631 = vmul.f32 %v624, %v628
      %632 = vrot.lane.b32.xlu0 %v600, 3
      %v633 = vpop.permute.xlu0 %632
      %634 = vrot.lane.b32.xlu0 %v601, 3
      %v635 = vpop.permute.xlu0 %634
      %vm636 = vcmp.lt.s32.totalorder %v277, 3
      %v637 = vsel %vm636, %v633, %v635
      %v638 = vsel %vm636, %v635, %v633
      %vm639 = vcmp.ge.s32.totalorder %v262, 3
      %v640 = vsel %vm639, 1, 0
      %v641 = vlaneseq
      %v642 = vshrl.u32 %v641, 7
      %v643 = vsub.s32 0, %v642
      %v644 = vrot.slane %v640, %v643
      %v645 = vlaneseq
      %v646 = vshrl.u32 %v645, 7
      %v647 = vsub.s32 1, %v646
      %v648 = vrot.slane %v640, %v647
      %vm649 = vcmp.eq.s32.totalorder %v644, 1
      %vm650 = vcmp.eq.s32.totalorder %v648, 1
      %v651 = vsel %vm649, %v638, 0.0
      %v652 = vsel %vm650, %v637, 0.0
      %653 = vset.pattern.permute.xlu0 1
      %654 = vperm.xlu0 %653, %v603
      %v655 = vpop.permute.xlu0 %654
      %v657 = vmul.f32 %v651, %v655
      %v658 = vmul.f32 %v652, %v655
      %v659 = vadd.f32 %v630, %v657
      %v660 = vadd.f32 %v631, %v658
      %661 = vrot.lane.b32.xlu0 %v600, 2
      %v662 = vpop.permute.xlu0 %661
      %663 = vrot.lane.b32.xlu0 %v601, 2
      %v664 = vpop.permute.xlu0 %663
      %vm665 = vcmp.lt.s32.totalorder %v277, 2
      %v666 = vsel %vm665, %v662, %v664
      %v667 = vsel %vm665, %v664, %v662
      %vm668 = vcmp.ge.s32.totalorder %v262, 2
      %v669 = vsel %vm668, 1, 0
      %v670 = vlaneseq
      %v671 = vshrl.u32 %v670, 7
      %v672 = vsub.s32 0, %v671
      %v673 = vrot.slane %v669, %v672
      %v674 = vlaneseq
      %v675 = vshrl.u32 %v674, 7
      %v676 = vsub.s32 1, %v675
      %v677 = vrot.slane %v669, %v676
      %vm678 = vcmp.eq.s32.totalorder %v673, 1
      %vm679 = vcmp.eq.s32.totalorder %v677, 1
      %v680 = vsel %vm678, %v667, 0.0
      %v681 = vsel %vm679, %v666, 0.0
      %682 = vset.pattern.permute.xlu0 2
      %683 = vperm.xlu0 %682, %v603
      %v684 = vpop.permute.xlu0 %683
      %v686 = vmul.f32 %v680, %v684
      %v687 = vmul.f32 %v681, %v684
      %v688 = vadd.f32 %v659, %v686
      %v689 = vadd.f32 %v660, %v687
      %690 = vrot.lane.b32.xlu0 %v600, 1
      %v691 = vpop.permute.xlu0 %690
      %692 = vrot.lane.b32.xlu0 %v601, 1
      %v693 = vpop.permute.xlu0 %692
      %v694 = vsel %vm366, %v691, %v693
      %v695 = vsel %vm366, %v693, %v691
      %v696 = vsel %vm378, %v695, 0.0
      %v697 = vsel %vm379, %v694, 0.0
      %698 = vset.pattern.permute.xlu0 3
      %699 = vperm.xlu0 %698, %v603
      %v700 = vpop.permute.xlu0 %699
      %v702 = vmul.f32 %v696, %v700
      %v703 = vmul.f32 %v697, %v700
      %v704 = vadd.f32 %v688, %v702
      %v705 = vadd.f32 %v689, %v703
      %706 = vset.pattern.permute.xlu0 4
      %707 = vperm.xlu0 %706, %v603
      %v708 = vpop.permute.xlu0 %707
      %v710 = vmul.f32 %v600, %v708
      %v711 = vmul.f32 %v601, %v708
      %v712 = vadd.f32 %v704, %v710
      %v713 = vadd.f32 %v705, %v711
      %714 = vrot.lane.b32.xlu0 %v600, 127
      %v715 = vpop.permute.xlu0 %714
      %716 = vrot.lane.b32.xlu0 %v601, 127
      %v717 = vpop.permute.xlu0 %716
      %v718 = vsel %vm409, %v715, %v717
      %v719 = vsel %vm409, %v717, %v715
      %v720 = vsel %vm421, %v718, 0.0
      %v721 = vsel %vm422, %v719, 0.0
      %722 = vset.pattern.permute.xlu0 5
      %723 = vperm.xlu0 %722, %v603
      %v724 = vpop.permute.xlu0 %723
      %v726 = vmul.f32 %v720, %v724
      %v727 = vmul.f32 %v721, %v724
      %v728 = vadd.f32 %v712, %v726
      %v729 = vadd.f32 %v713, %v727
      %730 = vrot.lane.b32.xlu0 %v600, 126
      %v731 = vpop.permute.xlu0 %730
      %732 = vrot.lane.b32.xlu0 %v601, 126
      %v733 = vpop.permute.xlu0 %732
      %vm734 = vcmp.lt.s32.totalorder %v277, 126
      %v735 = vsel %vm734, %v731, %v733
      %v736 = vsel %vm734, %v733, %v731
      %vm737 = vcmp.lt.s32.totalorder %v262, 14
      %v738 = vsel %vm737, 1, 0
      %v739 = vlaneseq
      %v740 = vshrl.u32 %v739, 7
      %v741 = vsub.s32 0, %v740
      %v742 = vrot.slane %v738, %v741
      %v743 = vlaneseq
      %v744 = vshrl.u32 %v743, 7
      %v745 = vsub.s32 1, %v744
      %v746 = vrot.slane %v738, %v745
      %vm747 = vcmp.eq.s32.totalorder %v742, 1
      %vm748 = vcmp.eq.s32.totalorder %v746, 1
      %v749 = vsel %vm747, %v735, 0.0
      %v750 = vsel %vm748, %v736, 0.0
      %751 = vset.pattern.permute.xlu0 6
      %752 = vperm.xlu0 %751, %v603
      %v753 = vpop.permute.xlu0 %752
      %v755 = vmul.f32 %v749, %v753
      %v756 = vmul.f32 %v750, %v753
      %v757 = vadd.f32 %v728, %v755
      %v758 = vadd.f32 %v729, %v756
      %759 = vrot.lane.b32.xlu0 %v600, 125
      %v760 = vpop.permute.xlu0 %759
      %761 = vrot.lane.b32.xlu0 %v601, 125
      %v762 = vpop.permute.xlu0 %761
      %vm763 = vcmp.lt.s32.totalorder %v277, 125
      %v764 = vsel %vm763, %v760, %v762
      %v765 = vsel %vm763, %v762, %v760
      %vm766 = vcmp.lt.s32.totalorder %v262, 13
      %v767 = vsel %vm766, 1, 0
      %v768 = vlaneseq
      %v769 = vshrl.u32 %v768, 7
      %v770 = vsub.s32 0, %v769
      %v771 = vrot.slane %v767, %v770
      %v772 = vlaneseq
      %v773 = vshrl.u32 %v772, 7
      %v774 = vsub.s32 1, %v773
      %v775 = vrot.slane %v767, %v774
      %vm776 = vcmp.eq.s32.totalorder %v771, 1
      %vm777 = vcmp.eq.s32.totalorder %v775, 1
      %v778 = vsel %vm776, %v764, 0.0
      %v779 = vsel %vm777, %v765, 0.0
      %780 = vset.pattern.permute.xlu0 7
      %781 = vperm.xlu0 %780, %v603
      %v782 = vpop.permute.xlu0 %781
      %v784 = vmul.f32 %v778, %v782
      %v785 = vmul.f32 %v779, %v782
      %v786 = vadd.f32 %v757, %v784
      %v787 = vadd.f32 %v758, %v785
      %788 = vrot.lane.b32.xlu0 %v600, 124
      %v789 = vpop.permute.xlu0 %788
      %790 = vrot.lane.b32.xlu0 %v601, 124
      %v791 = vpop.permute.xlu0 %790
      %vm792 = vcmp.lt.s32.totalorder %v277, 124
      %v793 = vsel %vm792, %v789, %v791
      %v794 = vsel %vm792, %v791, %v789
      %vm795 = vcmp.lt.s32.totalorder %v262, 12
      %v796 = vsel %vm795, 1, 0
      %v797 = vlaneseq
      %v798 = vshrl.u32 %v797, 7
      %v799 = vsub.s32 0, %v798
      %v800 = vrot.slane %v796, %v799
      %v801 = vlaneseq
      %v802 = vshrl.u32 %v801, 7
      %v803 = vsub.s32 1, %v802
      %v804 = vrot.slane %v796, %v803
      %vm805 = vcmp.eq.s32.totalorder %v800, 1
      %vm806 = vcmp.eq.s32.totalorder %v804, 1
      %v807 = vsel %vm805, %v793, 0.0
      %v808 = vsel %vm806, %v794, 0.0
      %809 = vset.pattern.permute.xlu0 8
      %810 = vperm.xlu0 %809, %v603
      %v811 = vpop.permute.xlu0 %810
      %v813 = vmul.f32 %v807, %v811
      %v814 = vmul.f32 %v808, %v811
      %v815 = vadd.f32 %v786, %v813
      %v816 = vadd.f32 %v787, %v814
      %s817 = scalar_lea.vmem %s5, 4
      %v818 = vld [vmem:[%s817] sm:$0xf]
      %s819 = scalar_lea.vmem %s4, 4
      %v820 = vld [vmem:[%s819] sm:$0xf]
      %822 = vset.pattern.permute.xlu0 0
      %823 = vperm.xlu0 %822, %v820
      %v824 = vpop.permute.xlu0 %823
      %v826 = vlaneseq
      %v827 = vshrl.u32 %v826, 7
      %v828 = vsub.s32 0, %v827
      %v829 = vrot.slane %v815, %v828
      %v830 = vlaneseq
      %v831 = vshrl.u32 %v830, 7
      %v832 = vsub.s32 0, %v831
      %v833 = vrot.slane %v816, %v832
      %v834 = vmul.f32 %v824, %v829
      %v835 = vmul.f32 %v824, %v833
      %836 = vset.pattern.permute.xlu0 1
      %837 = vperm.xlu0 %836, %v820
      %v838 = vpop.permute.xlu0 %837
      %v840 = vlaneseq
      %v841 = vshrl.u32 %v840, 7
      %v842 = vsub.s32 1, %v841
      %v843 = vrot.slane %v815, %v842
      %v844 = vlaneseq
      %v845 = vshrl.u32 %v844, 7
      %v846 = vsub.s32 1, %v845
      %v847 = vrot.slane %v816, %v846
      %v848 = vmul.f32 %v838, %v843
      %v849 = vmul.f32 %v838, %v847
      %v850 = vadd.f32 %v834, %v848
      %v851 = vadd.f32 %v835, %v849
      %852 = vset.pattern.permute.xlu0 2
      %853 = vperm.xlu0 %852, %v820
      %v854 = vpop.permute.xlu0 %853
      %v856 = vlaneseq
      %v857 = vshrl.u32 %v856, 7
      %v858 = vsub.s32 2, %v857
      %v859 = vrot.slane %v815, %v858
      %v860 = vlaneseq
      %v861 = vshrl.u32 %v860, 7
      %v862 = vsub.s32 2, %v861
      %v863 = vrot.slane %v816, %v862
      %v864 = vmul.f32 %v854, %v859
      %v865 = vmul.f32 %v854, %v863
      %v866 = vadd.f32 %v850, %v864
      %v867 = vadd.f32 %v851, %v865
      %868 = vset.pattern.permute.xlu0 3
      %869 = vperm.xlu0 %868, %v820
      %v870 = vpop.permute.xlu0 %869
      %v872 = vlaneseq
      %v873 = vshrl.u32 %v872, 7
      %v874 = vsub.s32 3, %v873
      %v875 = vrot.slane %v815, %v874
      %v876 = vlaneseq
      %v877 = vshrl.u32 %v876, 7
      %v878 = vsub.s32 3, %v877
      %v879 = vrot.slane %v816, %v878
      %v880 = vmul.f32 %v870, %v875
      %v881 = vmul.f32 %v870, %v879
      %v882 = vadd.f32 %v866, %v880
      %v883 = vadd.f32 %v867, %v881
      %885 = vset.pattern.permute.xlu0 0
      %886 = vperm.xlu0 %885, %v818
      %v887 = vpop.permute.xlu0 %886
      %v889 = vadd.f32 %v882, %v887
      %v890 = vadd.f32 %v883, %v887
      %891 = vst [vmem:[%s256 + $0x10] sm:$0xf] %v889
      %892 = vst [vmem:[%s256 + $0x18] sm:$0xf] %v890
      %v893 = vld [vmem:[%s250 + $0x10] sm:$0xf0]
      %v894 = vld [vmem:[%s250 + $0x18] sm:$0xf0]
      %s895 = scalar_lea.vmem %s3, 8
      %v896 = vld [vmem:[%s895] sm:$0xf]
      %v899 = vrot.slane %v893, 4
      %v900 = vrot.slane %v894, 4
      %903 = vrot.lane.b32.xlu0 %v899, 64
      %v904 = vpop.permute.xlu0 %903
      %905 = vrot.lane.b32.xlu0 %v900, 64
      %v906 = vpop.permute.xlu0 %905
      %vm907 = vcmp.lt.s32.totalorder %v277, 64
      %v908 = vsel %vm907, %v904, %v906
      %v909 = vsel %vm907, %v906, %v904
      %vm910 = vcmp.ge.s32.totalorder %v261, 4
      %v911 = vsel %vm910, 1, 0
      %v912 = vlaneseq
      %v913 = vshrl.u32 %v912, 7
      %v914 = vsub.s32 0, %v913
      %v915 = vrot.slane %v911, %v914
      %v916 = vlaneseq
      %v917 = vshrl.u32 %v916, 7
      %v918 = vsub.s32 1, %v917
      %v919 = vrot.slane %v911, %v918
      %vm920 = vcmp.eq.s32.totalorder %v915, 1
      %vm921 = vcmp.eq.s32.totalorder %v919, 1
      %v922 = vsel %vm920, %v909, 0.0
      %v923 = vsel %vm921, %v908, 0.0
      %925 = vset.pattern.permute.xlu0 0
      %926 = vperm.xlu0 %925, %v896
      %v927 = vpop.permute.xlu0 %926
      %v929 = vmul.f32 %v922, %v927
      %v930 = vmul.f32 %v923, %v927
      %931 = vrot.lane.b32.xlu0 %v899, 48
      %v932 = vpop.permute.xlu0 %931
      %933 = vrot.lane.b32.xlu0 %v900, 48
      %v934 = vpop.permute.xlu0 %933
      %vm935 = vcmp.lt.s32.totalorder %v277, 48
      %v936 = vsel %vm935, %v932, %v934
      %v937 = vsel %vm935, %v934, %v932
      %vm938 = vcmp.ge.s32.totalorder %v261, 3
      %v939 = vsel %vm938, 1, 0
      %v940 = vlaneseq
      %v941 = vshrl.u32 %v940, 7
      %v942 = vsub.s32 0, %v941
      %v943 = vrot.slane %v939, %v942
      %v944 = vlaneseq
      %v945 = vshrl.u32 %v944, 7
      %v946 = vsub.s32 1, %v945
      %v947 = vrot.slane %v939, %v946
      %vm948 = vcmp.eq.s32.totalorder %v943, 1
      %vm949 = vcmp.eq.s32.totalorder %v947, 1
      %v950 = vsel %vm948, %v937, 0.0
      %v951 = vsel %vm949, %v936, 0.0
      %952 = vset.pattern.permute.xlu0 1
      %953 = vperm.xlu0 %952, %v896
      %v954 = vpop.permute.xlu0 %953
      %v956 = vmul.f32 %v950, %v954
      %v957 = vmul.f32 %v951, %v954
      %v958 = vadd.f32 %v929, %v956
      %v959 = vadd.f32 %v930, %v957
      %960 = vrot.lane.b32.xlu0 %v899, 32
      %v961 = vpop.permute.xlu0 %960
      %962 = vrot.lane.b32.xlu0 %v900, 32
      %v963 = vpop.permute.xlu0 %962
      %vm964 = vcmp.lt.s32.totalorder %v277, 32
      %v965 = vsel %vm964, %v961, %v963
      %v966 = vsel %vm964, %v963, %v961
      %vm967 = vcmp.ge.s32.totalorder %v261, 2
      %v968 = vsel %vm967, 1, 0
      %v969 = vlaneseq
      %v970 = vshrl.u32 %v969, 7
      %v971 = vsub.s32 0, %v970
      %v972 = vrot.slane %v968, %v971
      %v973 = vlaneseq
      %v974 = vshrl.u32 %v973, 7
      %v975 = vsub.s32 1, %v974
      %v976 = vrot.slane %v968, %v975
      %vm977 = vcmp.eq.s32.totalorder %v972, 1
      %vm978 = vcmp.eq.s32.totalorder %v976, 1
      %v979 = vsel %vm977, %v966, 0.0
      %v980 = vsel %vm978, %v965, 0.0
      %981 = vset.pattern.permute.xlu0 2
      %982 = vperm.xlu0 %981, %v896
      %v983 = vpop.permute.xlu0 %982
      %v985 = vmul.f32 %v979, %v983
      %v986 = vmul.f32 %v980, %v983
      %v987 = vadd.f32 %v958, %v985
      %v988 = vadd.f32 %v959, %v986
      %989 = vrot.lane.b32.xlu0 %v899, 16
      %v990 = vpop.permute.xlu0 %989
      %991 = vrot.lane.b32.xlu0 %v900, 16
      %v992 = vpop.permute.xlu0 %991
      %v993 = vsel %vm308, %v990, %v992
      %v994 = vsel %vm308, %v992, %v990
      %v995 = vsel %vm320, %v994, 0.0
      %v996 = vsel %vm321, %v993, 0.0
      %997 = vset.pattern.permute.xlu0 3
      %998 = vperm.xlu0 %997, %v896
      %v999 = vpop.permute.xlu0 %998
      %v1001 = vmul.f32 %v995, %v999
      %v1002 = vmul.f32 %v996, %v999
      %v1003 = vadd.f32 %v987, %v1001
      %v1004 = vadd.f32 %v988, %v1002
      %1005 = vset.pattern.permute.xlu0 4
      %1006 = vperm.xlu0 %1005, %v896
      %v1007 = vpop.permute.xlu0 %1006
      %v1008 = vrot.slane %v1007, 4
      %v1010 = vmul.f32 %v893, %v1008
      %v1011 = vmul.f32 %v894, %v1008
      %v1014 = vrot.slane %v1010, 4
      %v1015 = vrot.slane %v1011, 4
      %v1018 = vadd.f32 %v1003, %v1014
      %v1019 = vadd.f32 %v1004, %v1015
      %1020 = vrot.lane.b32.xlu0 %v899, 112
      %v1021 = vpop.permute.xlu0 %1020
      %1022 = vrot.lane.b32.xlu0 %v900, 112
      %v1023 = vpop.permute.xlu0 %1022
      %v1024 = vsel %vm467, %v1021, %v1023
      %v1025 = vsel %vm467, %v1023, %v1021
      %v1026 = vsel %vm479, %v1024, 0.0
      %v1027 = vsel %vm480, %v1025, 0.0
      %1028 = vset.pattern.permute.xlu0 5
      %1029 = vperm.xlu0 %1028, %v896
      %v1030 = vpop.permute.xlu0 %1029
      %v1032 = vmul.f32 %v1026, %v1030
      %v1033 = vmul.f32 %v1027, %v1030
      %v1034 = vadd.f32 %v1018, %v1032
      %v1035 = vadd.f32 %v1019, %v1033
      %1036 = vrot.lane.b32.xlu0 %v899, 96
      %v1037 = vpop.permute.xlu0 %1036
      %1038 = vrot.lane.b32.xlu0 %v900, 96
      %v1039 = vpop.permute.xlu0 %1038
      %vm1040 = vcmp.lt.s32.totalorder %v277, 96
      %v1041 = vsel %vm1040, %v1037, %v1039
      %v1042 = vsel %vm1040, %v1039, %v1037
      %vm1043 = vcmp.lt.s32.totalorder %v261, 14
      %v1044 = vsel %vm1043, 1, 0
      %v1045 = vlaneseq
      %v1046 = vshrl.u32 %v1045, 7
      %v1047 = vsub.s32 0, %v1046
      %v1048 = vrot.slane %v1044, %v1047
      %v1049 = vlaneseq
      %v1050 = vshrl.u32 %v1049, 7
      %v1051 = vsub.s32 1, %v1050
      %v1052 = vrot.slane %v1044, %v1051
      %vm1053 = vcmp.eq.s32.totalorder %v1048, 1
      %vm1054 = vcmp.eq.s32.totalorder %v1052, 1
      %v1055 = vsel %vm1053, %v1041, 0.0
      %v1056 = vsel %vm1054, %v1042, 0.0
      %1057 = vset.pattern.permute.xlu0 6
      %1058 = vperm.xlu0 %1057, %v896
      %v1059 = vpop.permute.xlu0 %1058
      %v1061 = vmul.f32 %v1055, %v1059
      %v1062 = vmul.f32 %v1056, %v1059
      %v1063 = vadd.f32 %v1034, %v1061
      %v1064 = vadd.f32 %v1035, %v1062
      %1065 = vrot.lane.b32.xlu0 %v899, 80
      %v1066 = vpop.permute.xlu0 %1065
      %1067 = vrot.lane.b32.xlu0 %v900, 80
      %v1068 = vpop.permute.xlu0 %1067
      %vm1069 = vcmp.lt.s32.totalorder %v277, 80
      %v1070 = vsel %vm1069, %v1066, %v1068
      %v1071 = vsel %vm1069, %v1068, %v1066
      %vm1072 = vcmp.lt.s32.totalorder %v261, 13
      %v1073 = vsel %vm1072, 1, 0
      %v1074 = vlaneseq
      %v1075 = vshrl.u32 %v1074, 7
      %v1076 = vsub.s32 0, %v1075
      %v1077 = vrot.slane %v1073, %v1076
      %v1078 = vlaneseq
      %v1079 = vshrl.u32 %v1078, 7
      %v1080 = vsub.s32 1, %v1079
      %v1081 = vrot.slane %v1073, %v1080
      %vm1082 = vcmp.eq.s32.totalorder %v1077, 1
      %vm1083 = vcmp.eq.s32.totalorder %v1081, 1
      %v1084 = vsel %vm1082, %v1070, 0.0
      %v1085 = vsel %vm1083, %v1071, 0.0
      %1086 = vset.pattern.permute.xlu0 7
      %1087 = vperm.xlu0 %1086, %v896
      %v1088 = vpop.permute.xlu0 %1087
      %v1090 = vmul.f32 %v1084, %v1088
      %v1091 = vmul.f32 %v1085, %v1088
      %v1092 = vadd.f32 %v1063, %v1090
      %v1093 = vadd.f32 %v1064, %v1091
      %vm1094 = vcmp.lt.s32.totalorder %v261, 12
      %v1095 = vsel %vm1094, 1, 0
      %v1096 = vlaneseq
      %v1097 = vshrl.u32 %v1096, 7
      %v1098 = vsub.s32 0, %v1097
      %v1099 = vrot.slane %v1095, %v1098
      %v1100 = vlaneseq
      %v1101 = vshrl.u32 %v1100, 7
      %v1102 = vsub.s32 1, %v1101
      %v1103 = vrot.slane %v1095, %v1102
      %vm1104 = vcmp.eq.s32.totalorder %v1099, 1
      %vm1105 = vcmp.eq.s32.totalorder %v1103, 1
      %v1106 = vsel %vm1104, %v908, 0.0
      %v1107 = vsel %vm1105, %v909, 0.0
      %1108 = vset.pattern.permute.xlu0 8
      %1109 = vperm.xlu0 %1108, %v896
      %v1110 = vpop.permute.xlu0 %1109
      %v1112 = vmul.f32 %v1106, %v1110
      %v1113 = vmul.f32 %v1107, %v1110
      %v1114 = vadd.f32 %v1092, %v1112
      %v1115 = vadd.f32 %v1093, %v1113
      %s1116 = scalar_lea.vmem %s5, 8
      %v1117 = vld [vmem:[%s1116] sm:$0xf]
      %s1118 = scalar_lea.vmem %s4, 8
      %v1119 = vld [vmem:[%s1118] sm:$0xf]
      %1121 = vset.pattern.permute.xlu0 0
      %1122 = vperm.xlu0 %1121, %v1119
      %v1123 = vpop.permute.xlu0 %1122
      %v1125 = vlaneseq
      %v1126 = vshrl.u32 %v1125, 7
      %v1127 = vsub.s32 0, %v1126
      %v1128 = vrot.slane %v1114, %v1127
      %v1129 = vlaneseq
      %v1130 = vshrl.u32 %v1129, 7
      %v1131 = vsub.s32 0, %v1130
      %v1132 = vrot.slane %v1115, %v1131
      %v1133 = vmul.f32 %v1123, %v1128
      %v1134 = vmul.f32 %v1123, %v1132
      %1135 = vset.pattern.permute.xlu0 1
      %1136 = vperm.xlu0 %1135, %v1119
      %v1137 = vpop.permute.xlu0 %1136
      %v1139 = vlaneseq
      %v1140 = vshrl.u32 %v1139, 7
      %v1141 = vsub.s32 1, %v1140
      %v1142 = vrot.slane %v1114, %v1141
      %v1143 = vlaneseq
      %v1144 = vshrl.u32 %v1143, 7
      %v1145 = vsub.s32 1, %v1144
      %v1146 = vrot.slane %v1115, %v1145
      %v1147 = vmul.f32 %v1137, %v1142
      %v1148 = vmul.f32 %v1137, %v1146
      %v1149 = vadd.f32 %v1133, %v1147
      %v1150 = vadd.f32 %v1134, %v1148
      %1151 = vset.pattern.permute.xlu0 2
      %1152 = vperm.xlu0 %1151, %v1119
      %v1153 = vpop.permute.xlu0 %1152
      %v1155 = vlaneseq
      %v1156 = vshrl.u32 %v1155, 7
      %v1157 = vsub.s32 2, %v1156
      %v1158 = vrot.slane %v1114, %v1157
      %v1159 = vlaneseq
      %v1160 = vshrl.u32 %v1159, 7
      %v1161 = vsub.s32 2, %v1160
      %v1162 = vrot.slane %v1115, %v1161
      %v1163 = vmul.f32 %v1153, %v1158
      %v1164 = vmul.f32 %v1153, %v1162
      %v1165 = vadd.f32 %v1149, %v1163
      %v1166 = vadd.f32 %v1150, %v1164
      %1167 = vset.pattern.permute.xlu0 3
      %1168 = vperm.xlu0 %1167, %v1119
      %v1169 = vpop.permute.xlu0 %1168
      %v1171 = vlaneseq
      %v1172 = vshrl.u32 %v1171, 7
      %v1173 = vsub.s32 3, %v1172
      %v1174 = vrot.slane %v1114, %v1173
      %v1175 = vlaneseq
      %v1176 = vshrl.u32 %v1175, 7
      %v1177 = vsub.s32 3, %v1176
      %v1178 = vrot.slane %v1115, %v1177
      %v1179 = vmul.f32 %v1169, %v1174
      %v1180 = vmul.f32 %v1169, %v1178
      %v1181 = vadd.f32 %v1165, %v1179
      %v1182 = vadd.f32 %v1166, %v1180
      %1184 = vset.pattern.permute.xlu0 0
      %1185 = vperm.xlu0 %1184, %v1117
      %v1186 = vpop.permute.xlu0 %1185
      %v1188 = vadd.f32 %v1181, %v1186
      %v1189 = vadd.f32 %v1182, %v1186
      %v1192 = vrot.slane %v1188, 4
      %v1193 = vrot.slane %v1189, 4
      %1196 = vst [vmem:[%s256 + $0x10] sm:$0xf0] %v1192
      %1197 = vst [vmem:[%s256 + $0x18] sm:$0xf0] %v1193
      %p1198 = scmp.lt.s32.totalorder %s17, 1
      %s1199 = scalar_select %p1198, %s17, 1
      %s1200 = smul.addr %s1199, 8
      %s1201 = sadd.s32 4, %s1200
      %s1202 = smul.addr %s1201, 8
      %s1203 = scalar_lea.vmem %s6, %s1202
      // Predicated region
      $region45: #{inception_dwconv2d_lightweight.1} parent=43 // pred_check
        %p1204 = pneg %p166
      $region46: #{inception_dwconv2d_lightweight.1} parent=43 // pred_check_branch
        %1206 = sbr.rel (%p1204) target = $region48
      $region47: #{inception_dwconv2d_lightweight.1} parent=43 // pred_region
        _
      $region48: #{inception_dwconv2d_lightweight.1} parent=43 // pred_fallthru
        _
    $region44: #{inception_dwconv2d_lightweight.1} parent=5 // pred_fallthru
      _
    %p1207 = scmp.le.s32.totalorder 2, %s12
    // Predicated region
    $region49: #{inception_dwconv2d_lightweight.1} parent=5 // pred_check
      %p1208 = pneg %p1207
    $region50: #{inception_dwconv2d_lightweight.1} parent=5 // pred_check_branch
      %1210 = sbr.rel (%p1208) target = $region52
    $region51: #{inception_dwconv2d_lightweight.1} parent=5 // pred_region
      %s1211 = ssub.s32 %s12, 2
      // Predicated region
      $region53: #{inception_dwconv2d_lightweight.1} parent=51 // pred_check
        %p1212 = pneg %p172
      $region54: #{inception_dwconv2d_lightweight.1} parent=51 // pred_check_branch
        %1214 = sbr.rel (%p1212) target = $region56
      $region55: #{inception_dwconv2d_lightweight.1} parent=51 // pred_region
        %p1215 = scmp.lt.s32.totalorder %s18, 1
        %s1216 = scalar_select %p1215, %s18, 1
        %s1217 = smul.addr %s1216, 8
        %s1218 = sadd.s32 4, %s1217
        %s1219 = smul.addr %s1218, 8
        %s1220 = scalar_lea.vmem %s6, %s1219
      $region56: #{inception_dwconv2d_lightweight.1} parent=51 // pred_fallthru
        _
    $region52: #{inception_dwconv2d_lightweight.1} parent=5 // pred_fallthru
      _
  $region6: #{inception_dwconv2d_lightweight.1} parent=0 // loop_footer
    %s16 = sadd.s32 1, %s12
  $region7: #{inception_dwconv2d_lightweight.1} parent=0 // loop_footer_branch
    %11 = sbr.rel target = $region3
  $region8: #{inception_dwconv2d_lightweight.1} parent=0 // loop_exit
    _

</llo_original>
